<compile_context>
chip_gen: v7x
topology: tpu7x:2x2x1
jax: 0.10.0
libtpu: 0.0.40
codegen_flags: <defaults>
</compile_context>

<pallas_src>
import functools
import math

import jax
import jax.numpy as jnp
from jax.experimental import pallas as pl
from jax.experimental.pallas import tpu as pltpu


_VMEM_LIMIT_BYTES = 32 * 1024 * 1024


# -----------------------------------------------------------------------------
# Helpers
# -----------------------------------------------------------------------------
def _layernorm_fp32(x, gamma, beta, eps):
    # Fp32LayerNorm: compute in float32, biased variance, eps inside sqrt.
    mean = jnp.mean(x, axis=-1, keepdims=True)
    var = jnp.mean((x - mean) ** 2, axis=-1, keepdims=True)
    return (x - mean) * jax.lax.rsqrt(var + eps) * gamma + beta


def _choose_tile_m(m, max_tile=256):
    """Largest M tile <= max_tile that divides m and is sublane (8) aligned."""
    if m <= max_tile:
        return m
    for t in range(max_tile, 0, -8):
        if t % 8 == 0 and m % t == 0:
            return t
    return m  # fall back to a single tile


# -----------------------------------------------------------------------------
# Pallas kernels
# -----------------------------------------------------------------------------
def _attn_block_kernel(x_ref, kv_ref,
                       wq_ref, bq_ref, wk_ref, bk_ref, wv_ref, bv_ref,
                       wo_ref, bo_ref, g_ref, beta_ref,
                       out_ref, *, num_heads, eps):
    # Block shapes: x (1, Sq, Dq), kv (1, Skv, Dkv), wo (H, hd, Dq).
    _, Sq, Dq = x_ref.shape
    hd = Dq // num_heads
    scale = 1.0 / math.sqrt(hd)

    x_in = x_ref[0]
    x_f32 = x_in.astype(jnp.float32)        # residual path, fp32
    x_bf = x_in.astype(jnp.bfloat16)        # MXU operand
    kv_bf = kv_ref[0].astype(jnp.bfloat16)  # (Skv, Dkv)

    # Full-width QKV projections: single bf16 MXU GEMM each, f32 accumulation.
    # Biases are added once here (hoisted, not per head / per batch).
    q = jnp.dot(x_bf, wq_ref[...], preferred_element_type=jnp.float32) \
        + bq_ref[...].astype(jnp.float32)                                 # (Sq, Dq)
    k = jnp.dot(kv_bf, wk_ref[...], preferred_element_type=jnp.float32) \
        + bk_ref[...].astype(jnp.float32)                                 # (Skv, Dq)
    v = jnp.dot(kv_bf, wv_ref[...], preferred_element_type=jnp.float32) \
        + bv_ref[...].astype(jnp.float32)                                 # (Skv, Dq)

    # Per-head attention.  Heads are folded back through the (pre-split) output
    # projection by accumulation -> no concatenate / context relayout.
    o = jnp.zeros((Sq, Dq), jnp.float32)
    for h in range(num_heads):  # small static head count -> unrolled
        sl = slice(h * hd, (h + 1) * hd)
        qh = q[:, sl].astype(jnp.bfloat16)   # (Sq, hd)
        kh = k[:, sl].astype(jnp.bfloat16)   # (Skv, hd)
        vh = v[:, sl].astype(jnp.bfloat16)   # (Skv, hd)

        # scores = qh @ kh^T (contract over head_dim, no explicit transpose)
        s = jax.lax.dot_general(qh, kh, (((1,), (1,)), ((), ())),
                                preferred_element_type=jnp.float32) * scale  # (Sq, Skv)
        s_max = jnp.max(s, axis=-1, keepdims=True)
        e = jnp.exp(s - s_max)
        denom = jnp.sum(e, axis=-1, keepdims=True)
        p = (e * pl.reciprocal(denom, approx=True)).astype(jnp.bfloat16)

        ctx = jnp.dot(p, vh, preferred_element_type=jnp.float32)            # (Sq, hd)
        # accumulate this head's contribution to the output projection
        o = o + jnp.dot(ctx.astype(jnp.bfloat16), wo_ref[h],
                        preferred_element_type=jnp.float32)                 # (Sq, Dq)

    o = o + bo_ref[...].astype(jnp.float32)
    resid = o + x_f32
    out_ref[0] = _layernorm_fp32(resid,
                                 g_ref[...].astype(jnp.float32),
                                 beta_ref[...].astype(jnp.float32),
                                 eps).astype(out_ref.dtype)


def _ffn_block_kernel(x_ref, w1_ref, b1_ref, w2_ref, b2_ref, g_ref, beta_ref,
                      out_ref, *, eps):
    # x_ref block: (tile_m, D) with batch already folded into M.
    x_in = x_ref[...]
    x_f32 = x_in.astype(jnp.float32)
    x_bf = x_in.astype(jnp.bfloat16)

    h = jnp.dot(x_bf, w1_ref[...], preferred_element_type=jnp.float32) \
        + b1_ref[...].astype(jnp.float32)                                 # (tile_m, Dff)
    h = jnp.maximum(h, 0.0).astype(jnp.bfloat16)                          # ReLU
    y = jnp.dot(h, w2_ref[...], preferred_element_type=jnp.float32) \
        + b2_ref[...].astype(jnp.float32)                                 # (tile_m, D)

    resid = y + x_f32
    out_ref[...] = _layernorm_fp32(resid,
                                   g_ref[...].astype(jnp.float32),
                                   beta_ref[...].astype(jnp.float32),
                                   eps).astype(out_ref.dtype)


# -----------------------------------------------------------------------------
# Pallas call wrappers
# -----------------------------------------------------------------------------
def attn_block(x, kv, p, *, num_heads, eps):
    B, Sq, Dq = x.shape
    _, Skv, Dkv = kv.shape
    hd = Dq // num_heads
    kernel = functools.partial(_attn_block_kernel, num_heads=num_heads, eps=eps)
    return pl.pallas_call(
        kernel,
        out_shape=jax.ShapeDtypeStruct((B, Sq, Dq), x.dtype),
        grid=(B,),
        in_specs=[
            pl.BlockSpec((1, Sq, Dq), lambda b: (b, 0, 0)),          # x
            pl.BlockSpec((1, Skv, Dkv), lambda b: (b, 0, 0)),        # kv
            pl.BlockSpec((Dq, Dq), lambda b: (0, 0)),                # wq
            pl.BlockSpec((1, Dq), lambda b: (0, 0)),                 # bq
            pl.BlockSpec((Dkv, Dq), lambda b: (0, 0)),               # wk
            pl.BlockSpec((1, Dq), lambda b: (0, 0)),                 # bk
            pl.BlockSpec((Dkv, Dq), lambda b: (0, 0)),               # wv
            pl.BlockSpec((1, Dq), lambda b: (0, 0)),                 # bv
            pl.BlockSpec((num_heads, hd, Dq), lambda b: (0, 0, 0)),  # wo (per-head)
            pl.BlockSpec((1, Dq), lambda b: (0, 0)),                 # bo
            pl.BlockSpec((1, Dq), lambda b: (0, 0)),                 # ln gamma
            pl.BlockSpec((1, Dq), lambda b: (0, 0)),                 # ln beta
        ],
        out_specs=pl.BlockSpec((1, Sq, Dq), lambda b: (b, 0, 0)),
        compiler_params=pltpu.CompilerParams(
            dimension_semantics=("parallel",),
            vmem_limit_bytes=_VMEM_LIMIT_BYTES),
    )(x, kv, p["wq"], p["bq"], p["wk"], p["bk"], p["wv"], p["bv"],
      p["wo"], p["bo"], p["ln_g"], p["ln_b"])


def ffn_block(x, p, *, eps):
    B, S, D = x.shape
    M = B * S
    Dff = p["w1"].shape[1]
    x2 = x.reshape(M, D)                       # fold batch into GEMM M dim
    tile_m = _choose_tile_m(M)
    grid = (M // tile_m,)
    kernel = functools.partial(_ffn_block_kernel, eps=eps)
    out2 = pl.pallas_call(
        kernel,
        out_shape=jax.ShapeDtypeStruct((M, D), x.dtype),
        grid=grid,
        in_specs=[
            pl.BlockSpec((tile_m, D), lambda i: (i, 0)),   # x
            pl.BlockSpec((D, Dff), lambda i: (0, 0)),      # w1
            pl.BlockSpec((1, Dff), lambda i: (0, 0)),      # b1
            pl.BlockSpec((Dff, D), lambda i: (0, 0)),      # w2
            pl.BlockSpec((1, D), lambda i: (0, 0)),        # b2
            pl.BlockSpec((1, D), lambda i: (0, 0)),        # ln gamma
            pl.BlockSpec((1, D), lambda i: (0, 0)),        # ln beta
        ],
        out_specs=pl.BlockSpec((tile_m, D), lambda i: (i, 0)),
        compiler_params=pltpu.CompilerParams(
            dimension_semantics=("parallel",),
            vmem_limit_bytes=_VMEM_LIMIT_BYTES),
    )(x2, p["w1"], p["b1"], p["w2"], p["b2"], p["ln_g"], p["ln_b"])
    return out2.reshape(B, S, D)


# -----------------------------------------------------------------------------
# QformerLayer / QformerEncoder forward (glue in plain JAX, compute in Pallas)
# -----------------------------------------------------------------------------
def qformer_layer_forward(hidden_states, encoder_hidden_states, lp,
                          *, num_heads, query_length, eps):
    # self-attention block (residual + Fp32LayerNorm fused inside kernel)
    attn_residual = attn_block(hidden_states, hidden_states, lp["self_attn"],
                               num_heads=num_heads, eps=eps)

    if query_length > 0:
        query_attn_output = attn_residual[:, :query_length, :]
        if lp["has_cross_attention"]:
            query_attn_output = attn_block(query_attn_output, encoder_hidden_states,
                                           lp["cross_attn"], num_heads=num_heads, eps=eps)
        layer_output = ffn_block(query_attn_output, lp["ffq"], eps=eps)
        if attn_residual.shape[1] > query_length:
            layer_output_text = ffn_block(attn_residual[:, query_length:, :],
                                          lp["ff"], eps=eps)
            layer_output = jnp.concatenate([layer_output, layer_output_text], axis=1)
    else:
        layer_output = ffn_block(attn_residual, lp["ff"], eps=eps)
    return layer_output


def qformer_encoder_forward(hidden_states, encoder_hidden_states, params,
                            *, num_heads, query_length, eps=1e-12):
    x = hidden_states
    for lp in params:
        x = qformer_layer_forward(x, encoder_hidden_states, lp,
                                  num_heads=num_heads, query_length=query_length, eps=eps)
    # use_cache=False -> no past_key_values collected
    return x, []


# -----------------------------------------------------------------------------
# Deterministic parameter initialization (weights in bf16, biases/LN in f32)
# -----------------------------------------------------------------------------
_W_DTYPE = jnp.bfloat16


def _init_attn_params(key, dim_q, dim_kv, num_heads):
    ks = jax.random.split(key, 4)
    s = 0.02
    hd = dim_q // num_heads
    return {
        "wq": (s * jax.random.normal(ks[0], (dim_q, dim_q), jnp.float32)).astype(_W_DTYPE),
        "bq": jnp.zeros((1, dim_q), jnp.float32),
        "wk": (s * jax.random.normal(ks[1], (dim_kv, dim_q), jnp.float32)).astype(_W_DTYPE),
        "bk": jnp.zeros((1, dim_q), jnp.float32),
        "wv": (s * jax.random.normal(ks[2], (dim_kv, dim_q), jnp.float32)).astype(_W_DTYPE),
        "bv": jnp.zeros((1, dim_q), jnp.float32),
        # output projection pre-split per head: (num_heads, head_dim, dim_q)
        "wo": (s * jax.random.normal(ks[3], (dim_q, dim_q), jnp.float32)
               ).reshape(num_heads, hd, dim_q).astype(_W_DTYPE),
        "bo": jnp.zeros((1, dim_q), jnp.float32),
        "ln_g": jnp.ones((1, dim_q), jnp.float32),
        "ln_b": jnp.zeros((1, dim_q), jnp.float32),
    }


def _init_ffn_params(key, dim_q, dim_ff):
    ks = jax.random.split(key, 2)
    s = 0.02
    return {
        "w1": (s * jax.random.normal(ks[0], (dim_q, dim_ff), jnp.float32)).astype(_W_DTYPE),
        "b1": jnp.zeros((1, dim_ff), jnp.float32),
        "w2": (s * jax.random.normal(ks[1], (dim_ff, dim_q), jnp.float32)).astype(_W_DTYPE),
        "b2": jnp.zeros((1, dim_q), jnp.float32),
        "ln_g": jnp.ones((1, dim_q), jnp.float32),
        "ln_b": jnp.zeros((1, dim_q), jnp.float32),
    }


def init_qformer_encoder_params(key, num_hidden_layers, dim_q, dim_ff, dim_kv,
                                num_heads, cross_attention_freq=2):
    params = []
    keys = jax.random.split(key, num_hidden_layers)
    for i in range(num_hidden_layers):
        has_ca = (i % cross_attention_freq) == 0
        k_sa, k_ca, k_ff, k_ffq = jax.random.split(keys[i], 4)
        lp = {
            "has_cross_attention": has_ca,
            "self_attn": _init_attn_params(k_sa, dim_q, dim_q, num_heads),
            "ff": _init_ffn_params(k_ff, dim_q, dim_ff),
            "ffq": _init_ffn_params(k_ffq, dim_q, dim_ff),
        }
        if has_ca:
            lp["cross_attn"] = _init_attn_params(k_ca, dim_q, dim_kv, num_heads)
        params.append(lp)
    return params


# -----------------------------------------------------------------------------
# Demo
# -----------------------------------------------------------------------------
if __name__ == "__main__":
    key = jax.random.PRNGKey(0)
    k_x, k_enc, k_p = jax.random.split(key, 3)

    # small, module-consistent shapes
    batch = 2
    query_length = 4
    text_length = 4
    seq_len = query_length + text_length   # query tokens + text tokens
    dim_q = 32
    dim_feedforward = 64
    num_heads = 4
    dim_kv = 48                            # encoder (image) hidden dim
    enc_seq_len = 16
    num_hidden_layers = 2
    cross_attention_freq = 2               # layer 0 has cross-attention, layer 1 does not

    hidden_states = jax.random.normal(k_x, (batch, seq_len, dim_q), jnp.float32)
    encoder_hidden_states = jax.random.normal(k_enc, (batch, enc_seq_len, dim_kv),
                                              jnp.float32)

    params = init_qformer_encoder_params(k_p, num_hidden_layers, dim_q,
                                         dim_feedforward, dim_kv, num_heads,
                                         cross_attention_freq)

    out, present_kvs = qformer_encoder_forward(
        hidden_states, encoder_hidden_states, params,
        num_heads=num_heads, query_length=query_length, eps=1e-12)

    jax.block_until_ready(out)
    assert out.shape == (batch, seq_len, dim_q)
    assert out.dtype == hidden_states.dtype
    print("KERNEL_OK")
</pallas_src>

<mosaic_0001>
module attributes {stable_mosaic.version = 11 : i64} {
  func.func @_attn_block_kernel(%arg0: i32, %arg1: memref<1x8x32xf32, #tpu.memory_space<vmem>>, %arg2: memref<1x8x32xf32, #tpu.memory_space<vmem>>, %arg3: memref<32x32xbf16, #tpu.memory_space<vmem>>, %arg4: memref<1x32xf32, #tpu.memory_space<vmem>>, %arg5: memref<32x32xbf16, #tpu.memory_space<vmem>>, %arg6: memref<1x32xf32, #tpu.memory_space<vmem>>, %arg7: memref<32x32xbf16, #tpu.memory_space<vmem>>, %arg8: memref<1x32xf32, #tpu.memory_space<vmem>>, %arg9: memref<4x8x32xbf16, #tpu.memory_space<vmem>>, %arg10: memref<1x32xf32, #tpu.memory_space<vmem>>, %arg11: memref<1x32xf32, #tpu.memory_space<vmem>>, %arg12: memref<1x32xf32, #tpu.memory_space<vmem>>, %arg13: memref<1x8x32xf32, #tpu.memory_space<vmem>>) attributes {dimension_semantics = [#tpu.dimension_semantics<parallel>], iteration_bounds = array<i64: 2>, scalar_prefetch = 0 : i64, scratch_operands = 0 : i64, tpu.core_type = #tpu.core_type<tc>, window_params = [{transform_indices = @transform_0, window_bounds = array<i64: 1, 8, 32>}, {transform_indices = @transform_1, window_bounds = array<i64: 1, 8, 32>}, {pipeline_mode = #tpu.pipeline_mode<synchronous>, transform_indices = @transform_2, window_bounds = array<i64: 32, 32>}, {pipeline_mode = #tpu.pipeline_mode<synchronous>, transform_indices = @transform_3, window_bounds = array<i64: 1, 32>}, {pipeline_mode = #tpu.pipeline_mode<synchronous>, transform_indices = @transform_4, window_bounds = array<i64: 32, 32>}, {pipeline_mode = #tpu.pipeline_mode<synchronous>, transform_indices = @transform_5, window_bounds = array<i64: 1, 32>}, {pipeline_mode = #tpu.pipeline_mode<synchronous>, transform_indices = @transform_6, window_bounds = array<i64: 32, 32>}, {pipeline_mode = #tpu.pipeline_mode<synchronous>, transform_indices = @transform_7, window_bounds = array<i64: 1, 32>}, {pipeline_mode = #tpu.pipeline_mode<synchronous>, transform_indices = @transform_8, window_bounds = array<i64: 4, 8, 32>}, {pipeline_mode = #tpu.pipeline_mode<synchronous>, transform_indices = @transform_9, window_bounds = array<i64: 1, 32>}, {pipeline_mode = #tpu.pipeline_mode<synchronous>, transform_indices = @transform_10, window_bounds = array<i64: 1, 32>}, {pipeline_mode = #tpu.pipeline_mode<synchronous>, transform_indices = @transform_11, window_bounds = array<i64: 1, 32>}, {transform_indices = @transform_12, window_bounds = array<i64: 1, 8, 32>}]} {
    %c0 = arith.constant 0 : index
    %c0_0 = arith.constant 0 : index
    %c0_1 = arith.constant 0 : index
    %0 = vector.load %arg1[%c0, %c0_0, %c0_1] : memref<1x8x32xf32, #tpu.memory_space<vmem>>, vector<1x8x32xf32>
    %1 = vector.shape_cast %0 : vector<1x8x32xf32> to vector<8x32xf32>
    %2 = arith.truncf %1 : vector<8x32xf32> to vector<8x32xbf16>
    %c0_2 = arith.constant 0 : index
    %c0_3 = arith.constant 0 : index
    %c0_4 = arith.constant 0 : index
    %3 = vector.load %arg2[%c0_2, %c0_3, %c0_4] : memref<1x8x32xf32, #tpu.memory_space<vmem>>, vector<1x8x32xf32>
    %4 = vector.shape_cast %3 : vector<1x8x32xf32> to vector<8x32xf32>
    %5 = arith.truncf %4 : vector<8x32xf32> to vector<8x32xbf16>
    %c0_5 = arith.constant 0 : index
    %c0_6 = arith.constant 0 : index
    %6 = vector.load %arg3[%c0_5, %c0_6] : memref<32x32xbf16, #tpu.memory_space<vmem>>, vector<32x32xbf16>
    %cst = arith.constant dense<0.000000e+00> : vector<8x32xf32>
    %7 = tpu.matmul %2, %6, %cst {dimension_numbers = #tpu.dot_dimension_numbers<[1], [0], [0], [1], [0, 0, 1, 1], [], []>} : vector<8x32xbf16>, vector<32x32xbf16>, vector<8x32xf32> -> vector<8x32xf32>
    %c0_7 = arith.constant 0 : index
    %c0_8 = arith.constant 0 : index
    %8 = vector.load %arg4[%c0_7, %c0_8] : memref<1x32xf32, #tpu.memory_space<vmem>>, vector<1x32xf32>
    %9 = vector.broadcast %8 : vector<1x32xf32> to vector<8x32xf32>
    %10 = arith.addf %7, %9 : vector<8x32xf32>
    %c0_9 = arith.constant 0 : index
    %c0_10 = arith.constant 0 : index
    %11 = vector.load %arg5[%c0_9, %c0_10] : memref<32x32xbf16, #tpu.memory_space<vmem>>, vector<32x32xbf16>
    %cst_11 = arith.constant dense<0.000000e+00> : vector<8x32xf32>
    %12 = tpu.matmul %5, %11, %cst_11 {dimension_numbers = #tpu.dot_dimension_numbers<[1], [0], [0], [1], [0, 0, 1, 1], [], []>} : vector<8x32xbf16>, vector<32x32xbf16>, vector<8x32xf32> -> vector<8x32xf32>
    %c0_12 = arith.constant 0 : index
    %c0_13 = arith.constant 0 : index
    %13 = vector.load %arg6[%c0_12, %c0_13] : memref<1x32xf32, #tpu.memory_space<vmem>>, vector<1x32xf32>
    %14 = vector.broadcast %13 : vector<1x32xf32> to vector<8x32xf32>
    %15 = arith.addf %12, %14 : vector<8x32xf32>
    %c0_14 = arith.constant 0 : index
    %c0_15 = arith.constant 0 : index
    %16 = vector.load %arg7[%c0_14, %c0_15] : memref<32x32xbf16, #tpu.memory_space<vmem>>, vector<32x32xbf16>
    %cst_16 = arith.constant dense<0.000000e+00> : vector<8x32xf32>
    %17 = tpu.matmul %5, %16, %cst_16 {dimension_numbers = #tpu.dot_dimension_numbers<[1], [0], [0], [1], [0, 0, 1, 1], [], []>} : vector<8x32xbf16>, vector<32x32xbf16>, vector<8x32xf32> -> vector<8x32xf32>
    %c0_17 = arith.constant 0 : index
    %c0_18 = arith.constant 0 : index
    %18 = vector.load %arg8[%c0_17, %c0_18] : memref<1x32xf32, #tpu.memory_space<vmem>>, vector<1x32xf32>
    %19 = vector.broadcast %18 : vector<1x32xf32> to vector<8x32xf32>
    %20 = arith.addf %17, %19 : vector<8x32xf32>
    %cst_19 = arith.constant 0.000000e+00 : f32
    %21 = vector.broadcast %cst_19 : f32 to vector<8x32xf32>
    %22 = vector.extract_strided_slice %10 {offsets = [0, 0], sizes = [8, 8], strides = [1, 1]} : vector<8x32xf32> to vector<8x8xf32>
    %23 = arith.truncf %22 : vector<8x8xf32> to vector<8x8xbf16>
    %24 = vector.extract_strided_slice %15 {offsets = [0, 0], sizes = [8, 8], strides = [1, 1]} : vector<8x32xf32> to vector<8x8xf32>
    %25 = arith.truncf %24 : vector<8x8xf32> to vector<8x8xbf16>
    %26 = vector.extract_strided_slice %20 {offsets = [0, 0], sizes = [8, 8], strides = [1, 1]} : vector<8x32xf32> to vector<8x8xf32>
    %27 = arith.truncf %26 : vector<8x8xf32> to vector<8x8xbf16>
    %cst_20 = arith.constant dense<0.000000e+00> : vector<8x8xf32>
    %28 = tpu.matmul %23, %25, %cst_20 {dimension_numbers = #tpu.dot_dimension_numbers<[1], [1], [0], [0], [0, 0, 1, 0], [], []>} : vector<8x8xbf16>, vector<8x8xbf16>, vector<8x8xf32> -> vector<8x8xf32>
    %cst_21 = arith.constant 0.353553385 : f32
    %29 = vector.broadcast %cst_21 : f32 to vector<8x8xf32>
    %30 = arith.mulf %28, %29 : vector<8x8xf32>
    %cst_22 = arith.constant dense<0xFF800000> : vector<8xf32>
    %31 = vector.multi_reduction <maximumf>, %30, %cst_22 [1] : vector<8x8xf32> to vector<8xf32>
    %32 = vector.shape_cast %31 : vector<8xf32> to vector<8x1xf32>
    %33 = vector.broadcast %32 : vector<8x1xf32> to vector<8x8xf32>
    %34 = arith.subf %30, %33 : vector<8x8xf32>
    %35 = math.exp %34 : vector<8x8xf32>
    %cst_23 = arith.constant dense<0.000000e+00> : vector<8xf32>
    %36 = vector.multi_reduction <add>, %35, %cst_23 [1] : vector<8x8xf32> to vector<8xf32>
    %37 = vector.shape_cast %36 : vector<8xf32> to vector<8x1xf32>
    %38 = tpu.reciprocal %37 {approx = true} : vector<8x1xf32> -> vector<8x1xf32>
    %39 = vector.broadcast %38 : vector<8x1xf32> to vector<8x8xf32>
    %40 = arith.mulf %35, %39 : vector<8x8xf32>
    %41 = arith.truncf %40 : vector<8x8xf32> to vector<8x8xbf16>
    %cst_24 = arith.constant dense<0.000000e+00> : vector<8x8xf32>
    %42 = tpu.matmul %41, %27, %cst_24 {dimension_numbers = #tpu.dot_dimension_numbers<[1], [0], [0], [1], [0, 0, 1, 1], [], []>} : vector<8x8xbf16>, vector<8x8xbf16>, vector<8x8xf32> -> vector<8x8xf32>
    %43 = arith.truncf %42 : vector<8x8xf32> to vector<8x8xbf16>
    %c0_25 = arith.constant 0 : index
    %c0_26 = arith.constant 0 : index
    %c0_27 = arith.constant 0 : index
    %44 = vector.load %arg9[%c0_25, %c0_26, %c0_27] : memref<4x8x32xbf16, #tpu.memory_space<vmem>>, vector<1x8x32xbf16>
    %45 = vector.shape_cast %44 : vector<1x8x32xbf16> to vector<8x32xbf16>
    %cst_28 = arith.constant dense<0.000000e+00> : vector<8x32xf32>
    %46 = tpu.matmul %43, %45, %cst_28 {dimension_numbers = #tpu.dot_dimension_numbers<[1], [0], [0], [1], [0, 0, 1, 1], [], []>} : vector<8x8xbf16>, vector<8x32xbf16>, vector<8x32xf32> -> vector<8x32xf32>
    %47 = arith.addf %21, %46 : vector<8x32xf32>
    %48 = vector.extract_strided_slice %10 {offsets = [0, 8], sizes = [8, 8], strides = [1, 1]} : vector<8x32xf32> to vector<8x8xf32>
    %49 = arith.truncf %48 : vector<8x8xf32> to vector<8x8xbf16>
    %50 = vector.extract_strided_slice %15 {offsets = [0, 8], sizes = [8, 8], strides = [1, 1]} : vector<8x32xf32> to vector<8x8xf32>
    %51 = arith.truncf %50 : vector<8x8xf32> to vector<8x8xbf16>
    %52 = vector.extract_strided_slice %20 {offsets = [0, 8], sizes = [8, 8], strides = [1, 1]} : vector<8x32xf32> to vector<8x8xf32>
    %53 = arith.truncf %52 : vector<8x8xf32> to vector<8x8xbf16>
    %cst_29 = arith.constant dense<0.000000e+00> : vector<8x8xf32>
    %54 = tpu.matmul %49, %51, %cst_29 {dimension_numbers = #tpu.dot_dimension_numbers<[1], [1], [0], [0], [0, 0, 1, 0], [], []>} : vector<8x8xbf16>, vector<8x8xbf16>, vector<8x8xf32> -> vector<8x8xf32>
    %cst_30 = arith.constant 0.353553385 : f32
    %55 = vector.broadcast %cst_30 : f32 to vector<8x8xf32>
    %56 = arith.mulf %54, %55 : vector<8x8xf32>
    %cst_31 = arith.constant dense<0xFF800000> : vector<8xf32>
    %57 = vector.multi_reduction <maximumf>, %56, %cst_31 [1] : vector<8x8xf32> to vector<8xf32>
    %58 = vector.shape_cast %57 : vector<8xf32> to vector<8x1xf32>
    %59 = vector.broadcast %58 : vector<8x1xf32> to vector<8x8xf32>
    %60 = arith.subf %56, %59 : vector<8x8xf32>
    %61 = math.exp %60 : vector<8x8xf32>
    %cst_32 = arith.constant dense<0.000000e+00> : vector<8xf32>
    %62 = vector.multi_reduction <add>, %61, %cst_32 [1] : vector<8x8xf32> to vector<8xf32>
    %63 = vector.shape_cast %62 : vector<8xf32> to vector<8x1xf32>
    %64 = tpu.reciprocal %63 {approx = true} : vector<8x1xf32> -> vector<8x1xf32>
    %65 = vector.broadcast %64 : vector<8x1xf32> to vector<8x8xf32>
    %66 = arith.mulf %61, %65 : vector<8x8xf32>
    %67 = arith.truncf %66 : vector<8x8xf32> to vector<8x8xbf16>
    %cst_33 = arith.constant dense<0.000000e+00> : vector<8x8xf32>
    %68 = tpu.matmul %67, %53, %cst_33 {dimension_numbers = #tpu.dot_dimension_numbers<[1], [0], [0], [1], [0, 0, 1, 1], [], []>} : vector<8x8xbf16>, vector<8x8xbf16>, vector<8x8xf32> -> vector<8x8xf32>
    %69 = arith.truncf %68 : vector<8x8xf32> to vector<8x8xbf16>
    %c1 = arith.constant 1 : index
    %c0_34 = arith.constant 0 : index
    %c0_35 = arith.constant 0 : index
    %70 = vector.load %arg9[%c1, %c0_34, %c0_35] : memref<4x8x32xbf16, #tpu.memory_space<vmem>>, vector<1x8x32xbf16>
    %71 = vector.shape_cast %70 : vector<1x8x32xbf16> to vector<8x32xbf16>
    %cst_36 = arith.constant dense<0.000000e+00> : vector<8x32xf32>
    %72 = tpu.matmul %69, %71, %cst_36 {dimension_numbers = #tpu.dot_dimension_numbers<[1], [0], [0], [1], [0, 0, 1, 1], [], []>} : vector<8x8xbf16>, vector<8x32xbf16>, vector<8x32xf32> -> vector<8x32xf32>
    %73 = arith.addf %47, %72 : vector<8x32xf32>
    %74 = vector.extract_strided_slice %10 {offsets = [0, 16], sizes = [8, 8], strides = [1, 1]} : vector<8x32xf32> to vector<8x8xf32>
    %75 = arith.truncf %74 : vector<8x8xf32> to vector<8x8xbf16>
    %76 = vector.extract_strided_slice %15 {offsets = [0, 16], sizes = [8, 8], strides = [1, 1]} : vector<8x32xf32> to vector<8x8xf32>
    %77 = arith.truncf %76 : vector<8x8xf32> to vector<8x8xbf16>
    %78 = vector.extract_strided_slice %20 {offsets = [0, 16], sizes = [8, 8], strides = [1, 1]} : vector<8x32xf32> to vector<8x8xf32>
    %79 = arith.truncf %78 : vector<8x8xf32> to vector<8x8xbf16>
    %cst_37 = arith.constant dense<0.000000e+00> : vector<8x8xf32>
    %80 = tpu.matmul %75, %77, %cst_37 {dimension_numbers = #tpu.dot_dimension_numbers<[1], [1], [0], [0], [0, 0, 1, 0], [], []>} : vector<8x8xbf16>, vector<8x8xbf16>, vector<8x8xf32> -> vector<8x8xf32>
    %cst_38 = arith.constant 0.353553385 : f32
    %81 = vector.broadcast %cst_38 : f32 to vector<8x8xf32>
    %82 = arith.mulf %80, %81 : vector<8x8xf32>
    %cst_39 = arith.constant dense<0xFF800000> : vector<8xf32>
    %83 = vector.multi_reduction <maximumf>, %82, %cst_39 [1] : vector<8x8xf32> to vector<8xf32>
    %84 = vector.shape_cast %83 : vector<8xf32> to vector<8x1xf32>
    %85 = vector.broadcast %84 : vector<8x1xf32> to vector<8x8xf32>
    %86 = arith.subf %82, %85 : vector<8x8xf32>
    %87 = math.exp %86 : vector<8x8xf32>
    %cst_40 = arith.constant dense<0.000000e+00> : vector<8xf32>
    %88 = vector.multi_reduction <add>, %87, %cst_40 [1] : vector<8x8xf32> to vector<8xf32>
    %89 = vector.shape_cast %88 : vector<8xf32> to vector<8x1xf32>
    %90 = tpu.reciprocal %89 {approx = true} : vector<8x1xf32> -> vector<8x1xf32>
    %91 = vector.broadcast %90 : vector<8x1xf32> to vector<8x8xf32>
    %92 = arith.mulf %87, %91 : vector<8x8xf32>
    %93 = arith.truncf %92 : vector<8x8xf32> to vector<8x8xbf16>
    %cst_41 = arith.constant dense<0.000000e+00> : vector<8x8xf32>
    %94 = tpu.matmul %93, %79, %cst_41 {dimension_numbers = #tpu.dot_dimension_numbers<[1], [0], [0], [1], [0, 0, 1, 1], [], []>} : vector<8x8xbf16>, vector<8x8xbf16>, vector<8x8xf32> -> vector<8x8xf32>
    %95 = arith.truncf %94 : vector<8x8xf32> to vector<8x8xbf16>
    %c2 = arith.constant 2 : index
    %c0_42 = arith.constant 0 : index
    %c0_43 = arith.constant 0 : index
    %96 = vector.load %arg9[%c2, %c0_42, %c0_43] : memref<4x8x32xbf16, #tpu.memory_space<vmem>>, vector<1x8x32xbf16>
    %97 = vector.shape_cast %96 : vector<1x8x32xbf16> to vector<8x32xbf16>
    %cst_44 = arith.constant dense<0.000000e+00> : vector<8x32xf32>
    %98 = tpu.matmul %95, %97, %cst_44 {dimension_numbers = #tpu.dot_dimension_numbers<[1], [0], [0], [1], [0, 0, 1, 1], [], []>} : vector<8x8xbf16>, vector<8x32xbf16>, vector<8x32xf32> -> vector<8x32xf32>
    %99 = arith.addf %73, %98 : vector<8x32xf32>
    %100 = vector.extract_strided_slice %10 {offsets = [0, 24], sizes = [8, 8], strides = [1, 1]} : vector<8x32xf32> to vector<8x8xf32>
    %101 = arith.truncf %100 : vector<8x8xf32> to vector<8x8xbf16>
    %102 = vector.extract_strided_slice %15 {offsets = [0, 24], sizes = [8, 8], strides = [1, 1]} : vector<8x32xf32> to vector<8x8xf32>
    %103 = arith.truncf %102 : vector<8x8xf32> to vector<8x8xbf16>
    %104 = vector.extract_strided_slice %20 {offsets = [0, 24], sizes = [8, 8], strides = [1, 1]} : vector<8x32xf32> to vector<8x8xf32>
    %105 = arith.truncf %104 : vector<8x8xf32> to vector<8x8xbf16>
    %cst_45 = arith.constant dense<0.000000e+00> : vector<8x8xf32>
    %106 = tpu.matmul %101, %103, %cst_45 {dimension_numbers = #tpu.dot_dimension_numbers<[1], [1], [0], [0], [0, 0, 1, 0], [], []>} : vector<8x8xbf16>, vector<8x8xbf16>, vector<8x8xf32> -> vector<8x8xf32>
    %cst_46 = arith.constant 0.353553385 : f32
    %107 = vector.broadcast %cst_46 : f32 to vector<8x8xf32>
    %108 = arith.mulf %106, %107 : vector<8x8xf32>
    %cst_47 = arith.constant dense<0xFF800000> : vector<8xf32>
    %109 = vector.multi_reduction <maximumf>, %108, %cst_47 [1] : vector<8x8xf32> to vector<8xf32>
    %110 = vector.shape_cast %109 : vector<8xf32> to vector<8x1xf32>
    %111 = vector.broadcast %110 : vector<8x1xf32> to vector<8x8xf32>
    %112 = arith.subf %108, %111 : vector<8x8xf32>
    %113 = math.exp %112 : vector<8x8xf32>
    %cst_48 = arith.constant dense<0.000000e+00> : vector<8xf32>
    %114 = vector.multi_reduction <add>, %113, %cst_48 [1] : vector<8x8xf32> to vector<8xf32>
    %115 = vector.shape_cast %114 : vector<8xf32> to vector<8x1xf32>
    %116 = tpu.reciprocal %115 {approx = true} : vector<8x1xf32> -> vector<8x1xf32>
    %117 = vector.broadcast %116 : vector<8x1xf32> to vector<8x8xf32>
    %118 = arith.mulf %113, %117 : vector<8x8xf32>
    %119 = arith.truncf %118 : vector<8x8xf32> to vector<8x8xbf16>
    %cst_49 = arith.constant dense<0.000000e+00> : vector<8x8xf32>
    %120 = tpu.matmul %119, %105, %cst_49 {dimension_numbers = #tpu.dot_dimension_numbers<[1], [0], [0], [1], [0, 0, 1, 1], [], []>} : vector<8x8xbf16>, vector<8x8xbf16>, vector<8x8xf32> -> vector<8x8xf32>
    %121 = arith.truncf %120 : vector<8x8xf32> to vector<8x8xbf16>
    %c3 = arith.constant 3 : index
    %c0_50 = arith.constant 0 : index
    %c0_51 = arith.constant 0 : index
    %122 = vector.load %arg9[%c3, %c0_50, %c0_51] : memref<4x8x32xbf16, #tpu.memory_space<vmem>>, vector<1x8x32xbf16>
    %123 = vector.shape_cast %122 : vector<1x8x32xbf16> to vector<8x32xbf16>
    %cst_52 = arith.constant dense<0.000000e+00> : vector<8x32xf32>
    %124 = tpu.matmul %121, %123, %cst_52 {dimension_numbers = #tpu.dot_dimension_numbers<[1], [0], [0], [1], [0, 0, 1, 1], [], []>} : vector<8x8xbf16>, vector<8x32xbf16>, vector<8x32xf32> -> vector<8x32xf32>
    %125 = arith.addf %99, %124 : vector<8x32xf32>
    %c0_53 = arith.constant 0 : index
    %c0_54 = arith.constant 0 : index
    %126 = vector.load %arg10[%c0_53, %c0_54] : memref<1x32xf32, #tpu.memory_space<vmem>>, vector<1x32xf32>
    %127 = vector.broadcast %126 : vector<1x32xf32> to vector<8x32xf32>
    %128 = arith.addf %125, %127 : vector<8x32xf32>
    %129 = arith.addf %128, %1 : vector<8x32xf32>
    %c0_55 = arith.constant 0 : index
    %c0_56 = arith.constant 0 : index
    %130 = vector.load %arg11[%c0_55, %c0_56] : memref<1x32xf32, #tpu.memory_space<vmem>>, vector<1x32xf32>
    %c0_57 = arith.constant 0 : index
    %c0_58 = arith.constant 0 : index
    %131 = vector.load %arg12[%c0_57, %c0_58] : memref<1x32xf32, #tpu.memory_space<vmem>>, vector<1x32xf32>
    %cst_59 = arith.constant dense<0.000000e+00> : vector<8xf32>
    %132 = vector.multi_reduction <add>, %129, %cst_59 [1] : vector<8x32xf32> to vector<8xf32>
    %133 = vector.shape_cast %132 : vector<8xf32> to vector<8x1xf32>
    %cst_60 = arith.constant 3.200000e+01 : f32
    %134 = vector.broadcast %cst_60 : f32 to vector<8x1xf32>
    %135 = arith.divf %133, %134 : vector<8x1xf32>
    %136 = vector.broadcast %135 : vector<8x1xf32> to vector<8x32xf32>
    %137 = arith.subf %129, %136 : vector<8x32xf32>
    %138 = arith.mulf %137, %137 : vector<8x32xf32>
    %cst_61 = arith.constant dense<0.000000e+00> : vector<8xf32>
    %139 = vector.multi_reduction <add>, %138, %cst_61 [1] : vector<8x32xf32> to vector<8xf32>
    %140 = vector.shape_cast %139 : vector<8xf32> to vector<8x1xf32>
    %cst_62 = arith.constant 3.200000e+01 : f32
    %141 = vector.broadcast %cst_62 : f32 to vector<8x1xf32>
    %142 = arith.divf %140, %141 : vector<8x1xf32>
    %143 = vector.broadcast %135 : vector<8x1xf32> to vector<8x32xf32>
    %144 = arith.subf %129, %143 : vector<8x32xf32>
    %cst_63 = arith.constant 9.99999996E-13 : f32
    %145 = vector.broadcast %cst_63 : f32 to vector<8x1xf32>
    %146 = arith.addf %142, %145 : vector<8x1xf32>
    %147 = math.rsqrt %146 : vector<8x1xf32>
    %148 = vector.broadcast %147 : vector<8x1xf32> to vector<8x32xf32>
    %149 = arith.mulf %144, %148 : vector<8x32xf32>
    %150 = vector.broadcast %130 : vector<1x32xf32> to vector<8x32xf32>
    %151 = arith.mulf %149, %150 : vector<8x32xf32>
    %152 = vector.broadcast %131 : vector<1x32xf32> to vector<8x32xf32>
    %153 = arith.addf %151, %152 : vector<8x32xf32>
    %c0_64 = arith.constant 0 : index
    %c0_65 = arith.constant 0 : index
    %c0_66 = arith.constant 0 : index
    %154 = vector.load %arg13[%c0_64, %c0_65, %c0_66] : memref<1x8x32xf32, #tpu.memory_space<vmem>>, vector<1x8x32xf32>
    %155 = vector.shape_cast %154 : vector<1x8x32xf32> to vector<8x32xf32>
    %156 = vector.shape_cast %153 : vector<8x32xf32> to vector<1x8x32xf32>
    tpu.vector_store %arg13[%c0_64, %c0_65, %c0_66], %156 {strides = array<i32>} : memref<1x8x32xf32, #tpu.memory_space<vmem>>, vector<1x8x32xf32>,
    return
  }
  func.func @transform_0(%arg0: i32) -> (i32, i32, i32) {
    %c0_i32 = arith.constant 0 : i32
    %c0_i32_0 = arith.constant 0 : i32
    %c0_i32_1 = arith.constant 0 : i32
    return %arg0, %c0_i32, %c0_i32_0 : i32, i32, i32
  }
  func.func @transform_1(%arg0: i32) -> (i32, i32, i32) {
    %c0_i32 = arith.constant 0 : i32
    %c0_i32_0 = arith.constant 0 : i32
    %c0_i32_1 = arith.constant 0 : i32
    return %arg0, %c0_i32, %c0_i32_0 : i32, i32, i32
  }
  func.func @transform_2(%arg0: i32) -> (i32, i32) {
    %c0_i32 = arith.constant 0 : i32
    %c0_i32_0 = arith.constant 0 : i32
    %c0_i32_1 = arith.constant 0 : i32
    return %c0_i32, %c0_i32_0 : i32, i32
  }
  func.func @transform_3(%arg0: i32) -> (i32, i32) {
    %c0_i32 = arith.constant 0 : i32
    %c0_i32_0 = arith.constant 0 : i32
    %c0_i32_1 = arith.constant 0 : i32
    return %c0_i32, %c0_i32_0 : i32, i32
  }
  func.func @transform_4(%arg0: i32) -> (i32, i32) {
    %c0_i32 = arith.constant 0 : i32
    %c0_i32_0 = arith.constant 0 : i32
    %c0_i32_1 = arith.constant 0 : i32
    return %c0_i32, %c0_i32_0 : i32, i32
  }
  func.func @transform_5(%arg0: i32) -> (i32, i32) {
    %c0_i32 = arith.constant 0 : i32
    %c0_i32_0 = arith.constant 0 : i32
    %c0_i32_1 = arith.constant 0 : i32
    return %c0_i32, %c0_i32_0 : i32, i32
  }
  func.func @transform_6(%arg0: i32) -> (i32, i32) {
    %c0_i32 = arith.constant 0 : i32
    %c0_i32_0 = arith.constant 0 : i32
    %c0_i32_1 = arith.constant 0 : i32
    return %c0_i32, %c0_i32_0 : i32, i32
  }
  func.func @transform_7(%arg0: i32) -> (i32, i32) {
    %c0_i32 = arith.constant 0 : i32
    %c0_i32_0 = arith.constant 0 : i32
    %c0_i32_1 = arith.constant 0 : i32
    return %c0_i32, %c0_i32_0 : i32, i32
  }
  func.func @transform_8(%arg0: i32) -> (i32, i32, i32) {
    %c0_i32 = arith.constant 0 : i32
    %c0_i32_0 = arith.constant 0 : i32
    %c0_i32_1 = arith.constant 0 : i32
    %c0_i32_2 = arith.constant 0 : i32
    return %c0_i32, %c0_i32_0, %c0_i32_1 : i32, i32, i32
  }
  func.func @transform_9(%arg0: i32) -> (i32, i32) {
    %c0_i32 = arith.constant 0 : i32
    %c0_i32_0 = arith.constant 0 : i32
    %c0_i32_1 = arith.constant 0 : i32
    return %c0_i32, %c0_i32_0 : i32, i32
  }
  func.func @transform_10(%arg0: i32) -> (i32, i32) {
    %c0_i32 = arith.constant 0 : i32
    %c0_i32_0 = arith.constant 0 : i32
    %c0_i32_1 = arith.constant 0 : i32
    return %c0_i32, %c0_i32_0 : i32, i32
  }
  func.func @transform_11(%arg0: i32) -> (i32, i32) {
    %c0_i32 = arith.constant 0 : i32
    %c0_i32_0 = arith.constant 0 : i32
    %c0_i32_1 = arith.constant 0 : i32
    return %c0_i32, %c0_i32_0 : i32, i32
  }
  func.func @transform_12(%arg0: i32) -> (i32, i32, i32) {
    %c0_i32 = arith.constant 0 : i32
    %c0_i32_0 = arith.constant 0 : i32
    %c0_i32_1 = arith.constant 0 : i32
    return %arg0, %c0_i32, %c0_i32_0 : i32, i32, i32
  }
}

</mosaic_0001>

<llo_original>
// kernel: tpu_custom_call.1
$region0: #{tpu_custom_call.1}
  #allocation0 [shape = 'u32[]', space=smem, size = 0x4, offset = 0x4, fixed_abs, tag = 'smem constant byte address 0x4 - core index']
  #allocation1 [shape = 'u32[144,128]{1,0:T(1,128)}', space=vmem, size = 0x12000, scoped, tag = 'internal scratch']
  %s0 = inlined_call_operand.hbm [shape: f32[2,8,32], index: 0, kind: input, shape index: {}]
  %s1 = inlined_call_operand.hbm [shape: f32[2,8,32], index: 1, kind: input, shape index: {}]
  %s2 = inlined_call_operand.hbm [shape: bf16[32,32], index: 2, kind: input, shape index: {}]
  %s3 = inlined_call_operand.vmem [shape: f32[1,32], index: 3, kind: input, shape index: {}]
  %s4 = inlined_call_operand.hbm [shape: bf16[32,32], index: 4, kind: input, shape index: {}]
  %s5 = inlined_call_operand.vmem [shape: f32[1,32], index: 5, kind: input, shape index: {}]
  %s6 = inlined_call_operand.vmem [shape: bf16[32,32], index: 6, kind: input, shape index: {}]
  %s7 = inlined_call_operand.vmem [shape: f32[1,32], index: 7, kind: input, shape index: {}]
  %s8 = inlined_call_operand.hbm [shape: bf16[4,8,32], index: 8, kind: input, shape index: {}]
  %s9 = inlined_call_operand.vmem [shape: f32[1,32], index: 9, kind: input, shape index: {}]
  %s10 = inlined_call_operand.vmem [shape: f32[1,32], index: 10, kind: input, shape index: {}]
  %s11 = inlined_call_operand.vmem [shape: f32[1,32], index: 11, kind: input, shape index: {}]
  %s12 = inlined_call_operand.hbm [shape: f32[2,8,32], index: 12, kind: output, shape index: {}]
  %s13 = sld [smem:[#allocation0]]
  $region101: #{tpu_custom_call.1} parent=0
    _
  %s15 = ssub.s32 1, %s13
  %s16 = scalar_select 0, %s15, %s13
  $region1: #{tpu_custom_call.1} parent=0
    #allocation2 [shape = 'u8[8192]{0}', space=vmem, size = 0x2000, scoped, tag = 'input window, operand 0']
    #allocation3 [shape = 's32[2]{0}', space=sflag, size = 0x8, scoped, tag = 'scoped memory for tpu_custom_call.1']
    #allocation4 [shape = 's32[2]{0}', space=sflag, size = 0x8, scoped, tag = 'scoped memory for tpu_custom_call.1']
    #allocation5 [shape = 'u8[8192]{0}', space=vmem, size = 0x2000, scoped, tag = 'input window, operand 1']
    #allocation6 [shape = 's32[2]{0}', space=sflag, size = 0x8, scoped, tag = 'scoped memory for tpu_custom_call.1']
    #allocation7 [shape = 'u8[8192]{0}', space=vmem, size = 0x2000, scoped, tag = 'input window, operand 2, single buffered']
    #allocation8 [shape = 'u8[8192]{0}', space=vmem, size = 0x2000, scoped, tag = 'input window, operand 4, single buffered']
    #allocation9 [shape = 's32[1]{0}', space=sflag, size = 0x4, scoped, tag = 'scoped memory for tpu_custom_call.1']
    #allocation10 [shape = 'u8[8192]{0}', space=vmem, size = 0x2000, scoped, tag = 'input window, operand 8, single buffered']
    #allocation11 [shape = 'u8[8192]{0}', space=vmem, size = 0x2000, scoped, tag = 'output window, operand 0']
    %17 = vsyncpa [#allocation3], 0
    %s18 = scalar_lea.sflag [#allocation3], 1
    %19 = vsyncpa %s18, 0
    %20 = vsyncpa [#allocation6], 0
    %s21 = scalar_lea.sflag [#allocation6], 1
    %22 = vsyncpa %s21, 0
    %23 = vsyncpa [#allocation9], 0
    %24 = vsyncpa [#allocation4], 0
    %s25 = scalar_lea.sflag [#allocation4], 1
    %26 = vsyncpa %s25, 0
    loop: start=0, step=1, limit=4
    $region2: #{tpu_custom_call.1} parent=1 // loop_pre_header
      _
    $region3: #{tpu_custom_call.1} parent=1 // loop_header
      %s28 = sphi 0, %s32
      %p29 = scmp.ge.s32.totalorder %s28, 4
      %s38 = sphi 0, %s40
      %s41 = sphi 0, %s38
      %s42 = sphi 0, %s41
      %s58 = sphi 0, %s42
      %s64 = sphi 0, %s66
      %s67 = sphi 0, %s64
      %s68 = sphi 0, %s67
      %s84 = sphi 0, %s68
      %s88 = sphi 0, %s88
      %s90 = sphi 0, %s88
      %s91 = sphi 0, %s90
      %s105 = sphi 0, %s91
      %s109 = sphi 0, %s109
      %s111 = sphi 0, %s109
      %s112 = sphi 0, %s111
      %s126 = sphi 0, %s112
      %s130 = sphi 0, %s130
      %s132 = sphi 0, %s130
      %s133 = sphi 0, %s132
      %s147 = sphi 0, %s133
      %s151 = sphi 0, %s151
      %s153 = sphi 0, %s151
      %s154 = sphi 0, %s153
      %s168 = sphi 0, %s154
      %s172 = sphi 0, %s172
      %s174 = sphi 0, %s172
      %s175 = sphi 0, %s174
      %s189 = sphi 0, %s175
      %s193 = sphi 0, %s193
      %s195 = sphi 0, %s193
      %s196 = sphi 0, %s195
      %s210 = sphi 0, %s196
      %s214 = sphi 0, %s214
      %s216 = sphi 0, %s214
      %s217 = sphi 0, %s216
      %s231 = sphi 0, %s217
      %s235 = sphi 0, %s235
      %s237 = sphi 0, %s235
      %s238 = sphi 0, %s237
      %s252 = sphi 0, %s238
      %s256 = sphi 0, %s256
      %s258 = sphi 0, %s256
      %s259 = sphi 0, %s258
      %s273 = sphi 0, %s259
      %s277 = sphi 0, %s277
      %s279 = sphi 0, %s277
      %s280 = sphi 0, %s279
      %s294 = sphi 0, %s280
      %s300 = sphi 0, %s302
      %s303 = sphi 0, %s300
      %s304 = sphi 0, %s303
      %s320 = sphi 0, %s304
    $region4: #{tpu_custom_call.1} parent=1 // loop_header_branch
      %31 = sbr.rel (%p29) target = $region8
    $region5: #{tpu_custom_call.1} parent=1 // loop_body
      %s33 = ssub.s32 %s28, 1
      %s34 = ssub.s32 %s28, 2
      %s35 = sadd.s32 %s28, 1
      %s36 = ssub.s32 %s28, %s35
      %p37 = scmp.eq.s32.totalorder %s36, 0
      %s39 = sadd.s32 %s38, 1
      %s40 = scalar_select %p37, %s38, %s39
      %p43 = pneg %p37
      %p44 = scmp.eq.s32.totalorder %s28, 1
      %p45 = por %p43, %p44
      %p46 = scmp.ne.s32.totalorder %s38, %s41
      %p47 = scmp.eq.s32.totalorder %s28, 0
      %p48 = por %p46, %p47
      %p49 = scmp.ne.s32.totalorder %s38, %s41
      %p50 = scmp.eq.s32.totalorder %s33, 1
      %p51 = por %p49, %p50
      %p52 = scmp.ne.s32.totalorder %s41, %s42
      %p53 = scmp.eq.s32.totalorder %s33, 0
      %p54 = por %p52, %p53
      %p55 = scmp.ne.s32.totalorder %s41, %s42
      %p56 = scmp.eq.s32.totalorder %s34, 1
      %p57 = por %p55, %p56
      %p59 = scmp.ne.s32.totalorder %s42, %s58
      %p60 = scmp.eq.s32.totalorder %s34, 0
      %p61 = por %p59, %p60
      %s62 = ssub.s32 %s28, %s35
      %p63 = scmp.eq.s32.totalorder %s62, 0
      %s65 = sadd.s32 %s64, 1
      %s66 = scalar_select %p63, %s64, %s65
      %p69 = pneg %p63
      %p70 = scmp.eq.s32.totalorder %s28, 1
      %p71 = por %p69, %p70
      %p72 = scmp.ne.s32.totalorder %s64, %s67
      %p73 = scmp.eq.s32.totalorder %s28, 0
      %p74 = por %p72, %p73
      %p75 = scmp.ne.s32.totalorder %s64, %s67
      %p76 = scmp.eq.s32.totalorder %s33, 1
      %p77 = por %p75, %p76
      %p78 = scmp.ne.s32.totalorder %s67, %s68
      %p79 = scmp.eq.s32.totalorder %s33, 0
      %p80 = por %p78, %p79
      %p81 = scmp.ne.s32.totalorder %s67, %s68
      %p82 = scmp.eq.s32.totalorder %s34, 1
      %p83 = por %p81, %p82
      %p85 = scmp.ne.s32.totalorder %s68, %s84
      %p86 = scmp.eq.s32.totalorder %s34, 0
      %p87 = por %p85, %p86
      %s89 = sadd.s32 %s88, 1
      %p92 = scmp.eq.s32.totalorder %s28, 1
      %p93 = scmp.ne.s32.totalorder %s88, %s90
      %p94 = scmp.eq.s32.totalorder %s28, 0
      %p95 = por %p93, %p94
      %p96 = scmp.ne.s32.totalorder %s88, %s90
      %p97 = scmp.eq.s32.totalorder %s33, 1
      %p98 = por %p96, %p97
      %p99 = scmp.ne.s32.totalorder %s90, %s91
      %p100 = scmp.eq.s32.totalorder %s33, 0
      %p101 = por %p99, %p100
      %p102 = scmp.ne.s32.totalorder %s90, %s91
      %p103 = scmp.eq.s32.totalorder %s34, 1
      %p104 = por %p102, %p103
      %p106 = scmp.ne.s32.totalorder %s91, %s105
      %p107 = scmp.eq.s32.totalorder %s34, 0
      %p108 = por %p106, %p107
      %s110 = sadd.s32 %s109, 1
      %p113 = scmp.eq.s32.totalorder %s28, 1
      %p114 = scmp.ne.s32.totalorder %s109, %s111
      %p115 = scmp.eq.s32.totalorder %s28, 0
      %p116 = por %p114, %p115
      %p117 = scmp.ne.s32.totalorder %s109, %s111
      %p118 = scmp.eq.s32.totalorder %s33, 1
      %p119 = por %p117, %p118
      %p120 = scmp.ne.s32.totalorder %s111, %s112
      %p121 = scmp.eq.s32.totalorder %s33, 0
      %p122 = por %p120, %p121
      %p123 = scmp.ne.s32.totalorder %s111, %s112
      %p124 = scmp.eq.s32.totalorder %s34, 1
      %p125 = por %p123, %p124
      %p127 = scmp.ne.s32.totalorder %s112, %s126
      %p128 = scmp.eq.s32.totalorder %s34, 0
      %p129 = por %p127, %p128
      %s131 = sadd.s32 %s130, 1
      %p134 = scmp.eq.s32.totalorder %s28, 1
      %p135 = scmp.ne.s32.totalorder %s130, %s132
      %p136 = scmp.eq.s32.totalorder %s28, 0
      %p137 = por %p135, %p136
      %p138 = scmp.ne.s32.totalorder %s130, %s132
      %p139 = scmp.eq.s32.totalorder %s33, 1
      %p140 = por %p138, %p139
      %p141 = scmp.ne.s32.totalorder %s132, %s133
      %p142 = scmp.eq.s32.totalorder %s33, 0
      %p143 = por %p141, %p142
      %p144 = scmp.ne.s32.totalorder %s132, %s133
      %p145 = scmp.eq.s32.totalorder %s34, 1
      %p146 = por %p144, %p145
      %p148 = scmp.ne.s32.totalorder %s133, %s147
      %p149 = scmp.eq.s32.totalorder %s34, 0
      %p150 = por %p148, %p149
      %s152 = sadd.s32 %s151, 1
      %p155 = scmp.eq.s32.totalorder %s28, 1
      %p156 = scmp.ne.s32.totalorder %s151, %s153
      %p157 = scmp.eq.s32.totalorder %s28, 0
      %p158 = por %p156, %p157
      %p159 = scmp.ne.s32.totalorder %s151, %s153
      %p160 = scmp.eq.s32.totalorder %s33, 1
      %p161 = por %p159, %p160
      %p162 = scmp.ne.s32.totalorder %s153, %s154
      %p163 = scmp.eq.s32.totalorder %s33, 0
      %p164 = por %p162, %p163
      %p165 = scmp.ne.s32.totalorder %s153, %s154
      %p166 = scmp.eq.s32.totalorder %s34, 1
      %p167 = por %p165, %p166
      %p169 = scmp.ne.s32.totalorder %s154, %s168
      %p170 = scmp.eq.s32.totalorder %s34, 0
      %p171 = por %p169, %p170
      %s173 = sadd.s32 %s172, 1
      %p176 = scmp.eq.s32.totalorder %s28, 1
      %p177 = scmp.ne.s32.totalorder %s172, %s174
      %p178 = scmp.eq.s32.totalorder %s28, 0
      %p179 = por %p177, %p178
      %p180 = scmp.ne.s32.totalorder %s172, %s174
      %p181 = scmp.eq.s32.totalorder %s33, 1
      %p182 = por %p180, %p181
      %p183 = scmp.ne.s32.totalorder %s174, %s175
      %p184 = scmp.eq.s32.totalorder %s33, 0
      %p185 = por %p183, %p184
      %p186 = scmp.ne.s32.totalorder %s174, %s175
      %p187 = scmp.eq.s32.totalorder %s34, 1
      %p188 = por %p186, %p187
      %p190 = scmp.ne.s32.totalorder %s175, %s189
      %p191 = scmp.eq.s32.totalorder %s34, 0
      %p192 = por %p190, %p191
      %s194 = sadd.s32 %s193, 1
      %p197 = scmp.eq.s32.totalorder %s28, 1
      %p198 = scmp.ne.s32.totalorder %s193, %s195
      %p199 = scmp.eq.s32.totalorder %s28, 0
      %p200 = por %p198, %p199
      %p201 = scmp.ne.s32.totalorder %s193, %s195
      %p202 = scmp.eq.s32.totalorder %s33, 1
      %p203 = por %p201, %p202
      %p204 = scmp.ne.s32.totalorder %s195, %s196
      %p205 = scmp.eq.s32.totalorder %s33, 0
      %p206 = por %p204, %p205
      %p207 = scmp.ne.s32.totalorder %s195, %s196
      %p208 = scmp.eq.s32.totalorder %s34, 1
      %p209 = por %p207, %p208
      %p211 = scmp.ne.s32.totalorder %s196, %s210
      %p212 = scmp.eq.s32.totalorder %s34, 0
      %p213 = por %p211, %p212
      %s215 = sadd.s32 %s214, 1
      %p218 = scmp.eq.s32.totalorder %s28, 1
      %p219 = scmp.ne.s32.totalorder %s214, %s216
      %p220 = scmp.eq.s32.totalorder %s28, 0
      %p221 = por %p219, %p220
      %p222 = scmp.ne.s32.totalorder %s214, %s216
      %p223 = scmp.eq.s32.totalorder %s33, 1
      %p224 = por %p222, %p223
      %p225 = scmp.ne.s32.totalorder %s216, %s217
      %p226 = scmp.eq.s32.totalorder %s33, 0
      %p227 = por %p225, %p226
      %p228 = scmp.ne.s32.totalorder %s216, %s217
      %p229 = scmp.eq.s32.totalorder %s34, 1
      %p230 = por %p228, %p229
      %p232 = scmp.ne.s32.totalorder %s217, %s231
      %p233 = scmp.eq.s32.totalorder %s34, 0
      %p234 = por %p232, %p233
      %s236 = sadd.s32 %s235, 1
      %p239 = scmp.eq.s32.totalorder %s28, 1
      %p240 = scmp.ne.s32.totalorder %s235, %s237
      %p241 = scmp.eq.s32.totalorder %s28, 0
      %p242 = por %p240, %p241
      %p243 = scmp.ne.s32.totalorder %s235, %s237
      %p244 = scmp.eq.s32.totalorder %s33, 1
      %p245 = por %p243, %p244
      %p246 = scmp.ne.s32.totalorder %s237, %s238
      %p247 = scmp.eq.s32.totalorder %s33, 0
      %p248 = por %p246, %p247
      %p249 = scmp.ne.s32.totalorder %s237, %s238
      %p250 = scmp.eq.s32.totalorder %s34, 1
      %p251 = por %p249, %p250
      %p253 = scmp.ne.s32.totalorder %s238, %s252
      %p254 = scmp.eq.s32.totalorder %s34, 0
      %p255 = por %p253, %p254
      %s257 = sadd.s32 %s256, 1
      %p260 = scmp.eq.s32.totalorder %s28, 1
      %p261 = scmp.ne.s32.totalorder %s256, %s258
      %p262 = scmp.eq.s32.totalorder %s28, 0
      %p263 = por %p261, %p262
      %p264 = scmp.ne.s32.totalorder %s256, %s258
      %p265 = scmp.eq.s32.totalorder %s33, 1
      %p266 = por %p264, %p265
      %p267 = scmp.ne.s32.totalorder %s258, %s259
      %p268 = scmp.eq.s32.totalorder %s33, 0
      %p269 = por %p267, %p268
      %p270 = scmp.ne.s32.totalorder %s258, %s259
      %p271 = scmp.eq.s32.totalorder %s34, 1
      %p272 = por %p270, %p271
      %p274 = scmp.ne.s32.totalorder %s259, %s273
      %p275 = scmp.eq.s32.totalorder %s34, 0
      %p276 = por %p274, %p275
      %s278 = sadd.s32 %s277, 1
      %p281 = scmp.eq.s32.totalorder %s28, 1
      %p282 = scmp.ne.s32.totalorder %s277, %s279
      %p283 = scmp.eq.s32.totalorder %s28, 0
      %p284 = por %p282, %p283
      %p285 = scmp.ne.s32.totalorder %s277, %s279
      %p286 = scmp.eq.s32.totalorder %s33, 1
      %p287 = por %p285, %p286
      %p288 = scmp.ne.s32.totalorder %s279, %s280
      %p289 = scmp.eq.s32.totalorder %s33, 0
      %p290 = por %p288, %p289
      %p291 = scmp.ne.s32.totalorder %s279, %s280
      %p292 = scmp.eq.s32.totalorder %s34, 1
      %p293 = por %p291, %p292
      %p295 = scmp.ne.s32.totalorder %s280, %s294
      %p296 = scmp.eq.s32.totalorder %s34, 0
      %p297 = por %p295, %p296
      %s298 = ssub.s32 %s28, %s35
      %p299 = scmp.eq.s32.totalorder %s298, 0
      %s301 = sadd.s32 %s300, 1
      %s302 = scalar_select %p299, %s300, %s301
      %p305 = pneg %p299
      %p306 = scmp.eq.s32.totalorder %s28, 1
      %p307 = por %p305, %p306
      %p308 = scmp.ne.s32.totalorder %s300, %s303
      %p309 = scmp.eq.s32.totalorder %s28, 0
      %p310 = por %p308, %p309
      %p311 = scmp.ne.s32.totalorder %s300, %s303
      %p312 = scmp.eq.s32.totalorder %s33, 1
      %p313 = por %p311, %p312
      %p314 = scmp.ne.s32.totalorder %s303, %s304
      %p315 = scmp.eq.s32.totalorder %s33, 0
      %p316 = por %p314, %p315
      %p317 = scmp.ne.s32.totalorder %s303, %s304
      %p318 = scmp.eq.s32.totalorder %s34, 1
      %p319 = por %p317, %p318
      %p321 = scmp.ne.s32.totalorder %s304, %s320
      %p322 = scmp.eq.s32.totalorder %s34, 0
      %p323 = por %p321, %p322
      %p324 = scmp.le.s32.totalorder 1, %s28
      %p325 = scmp.lt.s32.totalorder %s28, 3
      %p326 = pnand %p324, %p325
      %p327 = pneg %p326
      // Predicated region
      $region9: #{tpu_custom_call.1} parent=5 // pred_check
        _
      $region10: #{tpu_custom_call.1} parent=5 // pred_check_branch
        %329 = sbr.rel (%p326) target = $region12
      $region11: #{tpu_custom_call.1} parent=5 // pred_region
        %s330 = ssub.s32 %s28, 1
        // Predicated region
        $region13: #{tpu_custom_call.1} parent=11 // pred_check
          %p331 = pneg %p101
        $region14: #{tpu_custom_call.1} parent=11 // pred_check_branch
          %333 = sbr.rel (%p331) target = $region16
        $region15: #{tpu_custom_call.1} parent=11 // pred_region
          %s335 = ssub.s32 256, 256
          %336 = vsyncadd [#allocation6], %s335
          %s337 = sshll.u32 [#allocation7], 4
          %s338 = int_to_ptr.vmem [resolvable:$true] %s337
          %343 = dma.hbm_to_vmem [thread:$0]  %s2, 256, %s338, [#allocation6], 64, 64, 4
        $region16: #{tpu_custom_call.1} parent=11 // pred_fallthru
          _
        // Predicated region
        $region17: #{tpu_custom_call.1} parent=11 // pred_check
          %p344 = pneg %p122
        $region18: #{tpu_custom_call.1} parent=11 // pred_check_branch
          %346 = sbr.rel (%p344) target = $region20
        $region19: #{tpu_custom_call.1} parent=11 // pred_region
          _
        $region20: #{tpu_custom_call.1} parent=11 // pred_fallthru
          _
        // Predicated region
        $region21: #{tpu_custom_call.1} parent=11 // pred_check
          %p347 = pneg %p143
        $region22: #{tpu_custom_call.1} parent=11 // pred_check_branch
          %349 = sbr.rel (%p347) target = $region24
        $region23: #{tpu_custom_call.1} parent=11 // pred_region
          %s351 = ssub.s32 256, 256
          %352 = vsyncadd [#allocation9], %s351
          %s353 = sshll.u32 [#allocation8], 4
          %s354 = int_to_ptr.vmem [resolvable:$true] %s353
          %359 = dma.hbm_to_vmem [thread:$0]  %s4, 256, %s354, [#allocation9], 64, 64, 4
        $region24: #{tpu_custom_call.1} parent=11 // pred_fallthru
          _
        // Predicated region
        $region25: #{tpu_custom_call.1} parent=11 // pred_check
          %p360 = pneg %p164
        $region26: #{tpu_custom_call.1} parent=11 // pred_check_branch
          %362 = sbr.rel (%p360) target = $region28
        $region27: #{tpu_custom_call.1} parent=11 // pred_region
          _
        $region28: #{tpu_custom_call.1} parent=11 // pred_fallthru
          _
        // Predicated region
        $region29: #{tpu_custom_call.1} parent=11 // pred_check
          %p363 = pneg %p185
        $region30: #{tpu_custom_call.1} parent=11 // pred_check_branch
          %365 = sbr.rel (%p363) target = $region32
        $region31: #{tpu_custom_call.1} parent=11 // pred_region
          _
        $region32: #{tpu_custom_call.1} parent=11 // pred_fallthru
          _
        // Predicated region
        $region33: #{tpu_custom_call.1} parent=11 // pred_check
          %p366 = pneg %p206
        $region34: #{tpu_custom_call.1} parent=11 // pred_check_branch
          %368 = sbr.rel (%p366) target = $region36
        $region35: #{tpu_custom_call.1} parent=11 // pred_region
          _
        $region36: #{tpu_custom_call.1} parent=11 // pred_fallthru
          _
        // Predicated region
        $region37: #{tpu_custom_call.1} parent=11 // pred_check
          %p369 = pneg %p227
        $region38: #{tpu_custom_call.1} parent=11 // pred_check_branch
          %371 = sbr.rel (%p369) target = $region40
        $region39: #{tpu_custom_call.1} parent=11 // pred_region
          %s373 = ssub.s32 256, 256
          %374 = vsyncadd [#allocation9], %s373
          %s375 = sshll.u32 [#allocation10], 4
          %s376 = int_to_ptr.vmem [resolvable:$true] %s375
          %381 = dma.hbm_to_vmem [thread:$0]  %s8, 256, %s376, [#allocation9], 64, 64, 4
        $region40: #{tpu_custom_call.1} parent=11 // pred_fallthru
          _
        // Predicated region
        $region41: #{tpu_custom_call.1} parent=11 // pred_check
          %p382 = pneg %p248
        $region42: #{tpu_custom_call.1} parent=11 // pred_check_branch
          %384 = sbr.rel (%p382) target = $region44
        $region43: #{tpu_custom_call.1} parent=11 // pred_region
          _
        $region44: #{tpu_custom_call.1} parent=11 // pred_fallthru
          _
        // Predicated region
        $region45: #{tpu_custom_call.1} parent=11 // pred_check
          %p385 = pneg %p269
        $region46: #{tpu_custom_call.1} parent=11 // pred_check_branch
          %387 = sbr.rel (%p385) target = $region48
        $region47: #{tpu_custom_call.1} parent=11 // pred_region
          _
        $region48: #{tpu_custom_call.1} parent=11 // pred_fallthru
          _
        // Predicated region
        $region49: #{tpu_custom_call.1} parent=11 // pred_check
          %p388 = pneg %p290
        $region50: #{tpu_custom_call.1} parent=11 // pred_check_branch
          %390 = sbr.rel (%p388) target = $region52
        $region51: #{tpu_custom_call.1} parent=11 // pred_region
          _
        $region52: #{tpu_custom_call.1} parent=11 // pred_fallthru
          _
      $region12: #{tpu_custom_call.1} parent=5 // pred_fallthru
        _
      %p391 = scmp.lt.s32.totalorder %s28, 2
      // Predicated region
      $region53: #{tpu_custom_call.1} parent=5 // pred_check
        %p392 = pneg %p391
      $region54: #{tpu_custom_call.1} parent=5 // pred_check_branch
        %394 = sbr.rel (%p392) target = $region56
      $region55: #{tpu_custom_call.1} parent=5 // pred_region
        // Predicated region
        $region57: #{tpu_custom_call.1} parent=55 // pred_check
          %p395 = pneg %p48
        $region58: #{tpu_custom_call.1} parent=55 // pred_check_branch
          %397 = sbr.rel (%p395) target = $region60
        $region59: #{tpu_custom_call.1} parent=55 // pred_region
          %s398 = sand.u32 %s38, 1
          %s399 = scalar_lea.sflag [#allocation3], %s398
          %s400 = sand.u32 %s38, 1
          %s401 = smul.addr %s400, 8
          %s402 = scalar_lea.vmem [#allocation2], %s401
          %s404 = ssub.s32 128, 128
          %405 = vsyncadd %s399, %s404
          %s406 = smul.addr %s28, 128
          %s407 = scalar_lea.hbm %s0, %s406
          %s409 = sshll.u32 %s402, 4
          %s410 = int_to_ptr.vmem [resolvable:$true] %s409
          %412 = dma.hbm_to_vmem [thread:$0]  %s407, 128, %s410, %s399
        $region60: #{tpu_custom_call.1} parent=55 // pred_fallthru
          _
        // Predicated region
        $region61: #{tpu_custom_call.1} parent=55 // pred_check
          %p413 = pneg %p74
        $region62: #{tpu_custom_call.1} parent=55 // pred_check_branch
          %415 = sbr.rel (%p413) target = $region64
        $region63: #{tpu_custom_call.1} parent=55 // pred_region
          %s416 = sand.u32 %s28, 1
          %s417 = scalar_lea.sflag [#allocation6], %s416
          %s418 = sand.u32 %s64, 1
          %s419 = smul.addr %s418, 8
          %s420 = scalar_lea.vmem [#allocation5], %s419
          %s422 = ssub.s32 128, 128
          %423 = vsyncadd %s417, %s422
          %s424 = smul.addr %s28, 128
          %s425 = scalar_lea.hbm %s1, %s424
          %s427 = sshll.u32 %s420, 4
          %s428 = int_to_ptr.vmem [resolvable:$true] %s427
          %430 = dma.hbm_to_vmem [thread:$0]  %s425, 128, %s428, %s417
        $region64: #{tpu_custom_call.1} parent=55 // pred_fallthru
          _
      $region56: #{tpu_custom_call.1} parent=5 // pred_fallthru
        _
      %p431 = scmp.le.s32.totalorder 1, %s28
      %p432 = scmp.lt.s32.totalorder %s28, 3
      %p433 = pnand %p431, %p432
      %p434 = pneg %p433
      // Predicated region
      $region65: #{tpu_custom_call.1} parent=5 // pred_check
        _
      $region66: #{tpu_custom_call.1} parent=5 // pred_check_branch
        %436 = sbr.rel (%p433) target = $region68
      $region67: #{tpu_custom_call.1} parent=5 // pred_region
        %s437 = ssub.s32 %s28, 1
        %s438 = sand.u32 %s41, 1
        %s439 = scalar_lea.sflag [#allocation3], %s438
        %s440 = sand.u32 %s41, 1
        %s441 = smul.addr %s440, 8
        %s442 = scalar_lea.vmem [#allocation2], %s441
        // Predicated region
        $region69: #{tpu_custom_call.1} parent=67 // pred_check
          %p443 = pneg %p54
        $region70: #{tpu_custom_call.1} parent=67 // pred_check_branch
          %445 = sbr.rel (%p443) target = $region72
        $region71: #{tpu_custom_call.1} parent=67 // pred_region
          %446 = dma.done %s439, 128
        $region72: #{tpu_custom_call.1} parent=67 // pred_fallthru
          _
        %s447 = sand.u32 %s33, 1
        %s448 = scalar_lea.sflag [#allocation6], %s447
        %s449 = sand.u32 %s67, 1
        %s450 = smul.addr %s449, 8
        %s451 = scalar_lea.vmem [#allocation5], %s450
        // Predicated region
        $region73: #{tpu_custom_call.1} parent=67 // pred_check
          %p452 = pneg %p80
        $region74: #{tpu_custom_call.1} parent=67 // pred_check_branch
          %454 = sbr.rel (%p452) target = $region76
        $region75: #{tpu_custom_call.1} parent=67 // pred_region
          %455 = dma.done %s448, 128
        $region76: #{tpu_custom_call.1} parent=67 // pred_fallthru
          _
        // Predicated region
        $region77: #{tpu_custom_call.1} parent=67 // pred_check
          %p456 = pneg %p101
        $region78: #{tpu_custom_call.1} parent=67 // pred_check_branch
          %458 = sbr.rel (%p456) target = $region80
        $region79: #{tpu_custom_call.1} parent=67 // pred_region
          %459 = dma.done [#allocation6], 256
        $region80: #{tpu_custom_call.1} parent=67 // pred_fallthru
          _
        // Predicated region
        $region81: #{tpu_custom_call.1} parent=67 // pred_check
          %p460 = pneg %p143
        $region82: #{tpu_custom_call.1} parent=67 // pred_check_branch
          %462 = sbr.rel (%p460) target = $region84
        $region83: #{tpu_custom_call.1} parent=67 // pred_region
          %463 = dma.done [#allocation9], 256
        $region84: #{tpu_custom_call.1} parent=67 // pred_fallthru
          _
        // Predicated region
        $region85: #{tpu_custom_call.1} parent=67 // pred_check
          %p464 = pneg %p227
        $region86: #{tpu_custom_call.1} parent=67 // pred_check_branch
          %466 = sbr.rel (%p464) target = $region88
        $region87: #{tpu_custom_call.1} parent=67 // pred_region
          %467 = dma.done [#allocation9], 256
        $region88: #{tpu_custom_call.1} parent=67 // pred_fallthru
          _
        %s468 = sand.u32 %s41, 1
        %s469 = scalar_lea.sflag [#allocation3], %s468
        %s470 = sand.u32 %s41, 1
        %s471 = smul.addr %s470, 8
        %s472 = scalar_lea.vmem [#allocation2], %s471
        %p473 = pneg %p54
        %p474 = pneg %p51
        %s475 = sand.u32 %s33, 1
        %s476 = scalar_lea.sflag [#allocation6], %s475
        %s477 = sand.u32 %s67, 1
        %s478 = smul.addr %s477, 8
        %s479 = scalar_lea.vmem [#allocation5], %s478
        %p480 = pneg %p80
        %p481 = pneg %p77
        %p482 = pneg %p101
        %p483 = pneg %p98
        %p484 = pneg %p122
        %p485 = pneg %p119
        %p486 = pneg %p143
        %p487 = pneg %p140
        %p488 = pneg %p164
        %p489 = pneg %p161
        %p490 = pneg %p185
        %p491 = pneg %p182
        %p492 = pneg %p206
        %p493 = pneg %p203
        %p494 = pneg %p227
        %p495 = pneg %p224
        %p496 = pneg %p248
        %p497 = pneg %p245
        %p498 = pneg %p269
        %p499 = pneg %p266
        %p500 = pneg %p290
        %p501 = pneg %p287
        %p502 = pneg %p316
        %p503 = pneg %p313
        %s504 = sand.u32 %s303, 1
        %s505 = scalar_lea.sflag [#allocation4], %s504
        %s506 = sand.u32 %s303, 1
        %s507 = smul.addr %s506, 8
        %s508 = scalar_lea.vmem [#allocation11], %s507
        %v510 = vld [vmem:[%s442] sm:$0xff]
        %v511 = vpack.c.bf16 %v510, %v510
        %v512 = vld [vmem:[%s451] sm:$0xff]
        %v513 = vpack.c.bf16 %v512, %v512
        %v514 = vld [vmem:[#allocation7] sm:$0xf]
        %v515 = vld [vmem:[#allocation7 + $0x4] sm:$0xf]
        %v516 = vld [vmem:[#allocation7 + $0x8] sm:$0xf]
        %v517 = vld [vmem:[#allocation7 + $0xc] sm:$0xf]
        %v518 = vld [vmem:[%s3] sm:$0x1]
        %v520 = vlaneseq
        %v521 = vshrl.u32 %v520, 7
        %v522 = vsub.s32 0, %v521
        %v523 = vrot.slane %v518, %v522
        %v529 = vunpack.c.l.b16 %v514
        %v530 = vunpack.c.l.b16 %v515
        %v531 = vunpack.c.l.b16 %v516
        %v532 = vunpack.c.l.b16 %v517
        %v533 = vpack.c.b16 %v530, %v529
        %v534 = vpack.c.b16 %v532, %v531
        %vm537 = vcmask 261120
        %v539 = vsel %vm537, %v511, 0
        %541 = vmatprep.subr.bf16.mxu0 0
        %542 = vmatpush1.bf16.msra.mxu0 %v533
        %543 = vmatprep.subr.bf16.mxu0 0
        %544 = vmatpush1.bf16.msra.mxu0 %v534
        %545 = vmatprep.subr.bf16.mxu0 0
        %546 = vmatpush1.bf16.msra.mxu0 0
        %547 = vmatprep.subr.bf16.mxu0 0
        %548 = vmatpush1.bf16.msra.mxu0 0
        %549 = vmatprep.subr.bf16.mxu0 0
        %550 = vmatpush1.bf16.msra.mxu0 0
        %551 = vmatprep.subr.bf16.mxu0 0
        %552 = vmatpush1.bf16.msra.mxu0 0
        %553 = vmatprep.subr.bf16.mxu0 0
        %554 = vmatpush1.bf16.msra.mxu0 0
        %555 = vmatprep.subr.bf16.mxu0 0
        %556 = vmatpush1.bf16.msra.mxu0 0
        %557 = vmatprep.subr.bf16.mxu0 0
        %558 = vmatpush1.bf16.msra.mxu0 0
        %559 = vmatprep.subr.bf16.mxu0 0
        %560 = vmatpush1.bf16.msra.mxu0 0
        %561 = vmatprep.subr.bf16.mxu0 0
        %562 = vmatpush1.bf16.msra.mxu0 0
        %563 = vmatprep.subr.bf16.mxu0 0
        %564 = vmatpush1.bf16.msra.mxu0 0
        %565 = vmatprep.subr.bf16.mxu0 0
        %566 = vmatpush1.bf16.msra.mxu0 0
        %567 = vmatprep.subr.bf16.mxu0 0
        %568 = vmatpush1.bf16.msra.mxu0 0
        %569 = vmatprep.subr.bf16.mxu0 0
        %570 = vmatpush1.bf16.msra.mxu0 0
        %571 = vmatprep.subr.bf16.mxu0 0
        %572 = vmatpush1.bf16.msra.mxu0 0
        %573 = vmatprep.mubr.bf16.mxu0 0
        %574 = vmatmul.mubr.bf16.gmra.mrb[0].mxu0 %v539
        %v575 = vpop.f32.mrb[0].mxu0
        %v576 = vadd.f32 %v523, %v575
        %v577 = vpop.f32.mrb[0].mxu0
        %v578 = vpop.f32.mrb[0].mxu0
        %v579 = vpop.f32.mrb[0].mxu0
        %580 = vdwg.mxu0
        %v581 = vld [vmem:[#allocation8] sm:$0xf]
        %v582 = vld [vmem:[#allocation8 + $0x4] sm:$0xf]
        %v583 = vld [vmem:[#allocation8 + $0x8] sm:$0xf]
        %v584 = vld [vmem:[#allocation8 + $0xc] sm:$0xf]
        %v585 = vld [vmem:[%s5] sm:$0x1]
        %v587 = vlaneseq
        %v588 = vshrl.u32 %v587, 7
        %v589 = vsub.s32 0, %v588
        %v590 = vrot.slane %v585, %v589
        %v596 = vunpack.c.l.b16 %v581
        %v597 = vunpack.c.l.b16 %v582
        %v598 = vunpack.c.l.b16 %v583
        %v599 = vunpack.c.l.b16 %v584
        %v600 = vpack.c.b16 %v597, %v596
        %v601 = vpack.c.b16 %v599, %v598
        %v605 = vsel %vm537, %v513, 0
        %607 = vmatprep.subr.bf16.mxu0 0
        %608 = vmatpush1.bf16.msra.mxu0 %v600
        %609 = vmatprep.subr.bf16.mxu0 0
        %610 = vmatpush1.bf16.msra.mxu0 %v601
        %611 = vmatprep.subr.bf16.mxu0 0
        %612 = vmatpush1.bf16.msra.mxu0 0
        %613 = vmatprep.subr.bf16.mxu0 0
        %614 = vmatpush1.bf16.msra.mxu0 0
        %615 = vmatprep.subr.bf16.mxu0 0
        %616 = vmatpush1.bf16.msra.mxu0 0
        %617 = vmatprep.subr.bf16.mxu0 0
        %618 = vmatpush1.bf16.msra.mxu0 0
        %619 = vmatprep.subr.bf16.mxu0 0
        %620 = vmatpush1.bf16.msra.mxu0 0
        %621 = vmatprep.subr.bf16.mxu0 0
        %622 = vmatpush1.bf16.msra.mxu0 0
        %623 = vmatprep.subr.bf16.mxu0 0
        %624 = vmatpush1.bf16.msra.mxu0 0
        %625 = vmatprep.subr.bf16.mxu0 0
        %626 = vmatpush1.bf16.msra.mxu0 0
        %627 = vmatprep.subr.bf16.mxu0 0
        %628 = vmatpush1.bf16.msra.mxu0 0
        %629 = vmatprep.subr.bf16.mxu0 0
        %630 = vmatpush1.bf16.msra.mxu0 0
        %631 = vmatprep.subr.bf16.mxu0 0
        %632 = vmatpush1.bf16.msra.mxu0 0
        %633 = vmatprep.subr.bf16.mxu0 0
        %634 = vmatpush1.bf16.msra.mxu0 0
        %635 = vmatprep.subr.bf16.mxu0 0
        %636 = vmatpush1.bf16.msra.mxu0 0
        %637 = vmatprep.subr.bf16.mxu0 0
        %638 = vmatpush1.bf16.msra.mxu0 0
        %639 = vmatprep.mubr.bf16.mxu0 0
        %640 = vmatmul.mubr.bf16.gmra.mrb[0].mxu0 %v605
        %v641 = vpop.f32.mrb[0].mxu0
        %v642 = vadd.f32 %v590, %v641
        %v643 = vpop.f32.mrb[0].mxu0
        %v644 = vpop.f32.mrb[0].mxu0
        %v645 = vpop.f32.mrb[0].mxu0
        %646 = vdwg.mxu0
        %v647 = vld [vmem:[%s6] sm:$0xf]
        %v648 = vld [vmem:[%s6 + $0x4] sm:$0xf]
        %v649 = vld [vmem:[%s6 + $0x8] sm:$0xf]
        %v650 = vld [vmem:[%s6 + $0xc] sm:$0xf]
        %v651 = vld [vmem:[%s7] sm:$0x1]
        %v653 = vlaneseq
        %v654 = vshrl.u32 %v653, 7
        %v655 = vsub.s32 0, %v654
        %v656 = vrot.slane %v651, %v655
        %v662 = vunpack.c.l.b16 %v647
        %v663 = vunpack.c.l.b16 %v648
        %v664 = vunpack.c.l.b16 %v649
        %v665 = vunpack.c.l.b16 %v650
        %v666 = vpack.c.b16 %v663, %v662
        %v667 = vpack.c.b16 %v665, %v664
        %670 = vmatprep.subr.bf16.mxu0 0
        %671 = vmatpush1.bf16.msra.mxu0 %v666
        %672 = vmatprep.subr.bf16.mxu0 0
        %673 = vmatpush1.bf16.msra.mxu0 %v667
        %674 = vmatprep.subr.bf16.mxu0 0
        %675 = vmatpush1.bf16.msra.mxu0 0
        %676 = vmatprep.subr.bf16.mxu0 0
        %677 = vmatpush1.bf16.msra.mxu0 0
        %678 = vmatprep.subr.bf16.mxu0 0
        %679 = vmatpush1.bf16.msra.mxu0 0
        %680 = vmatprep.subr.bf16.mxu0 0
        %681 = vmatpush1.bf16.msra.mxu0 0
        %682 = vmatprep.subr.bf16.mxu0 0
        %683 = vmatpush1.bf16.msra.mxu0 0
        %684 = vmatprep.subr.bf16.mxu0 0
        %685 = vmatpush1.bf16.msra.mxu0 0
        %686 = vmatprep.subr.bf16.mxu0 0
        %687 = vmatpush1.bf16.msra.mxu0 0
        %688 = vmatprep.subr.bf16.mxu0 0
        %689 = vmatpush1.bf16.msra.mxu0 0
        %690 = vmatprep.subr.bf16.mxu0 0
        %691 = vmatpush1.bf16.msra.mxu0 0
        %692 = vmatprep.subr.bf16.mxu0 0
        %693 = vmatpush1.bf16.msra.mxu0 0
        %694 = vmatprep.subr.bf16.mxu0 0
        %695 = vmatpush1.bf16.msra.mxu0 0
        %696 = vmatprep.subr.bf16.mxu0 0
        %697 = vmatpush1.bf16.msra.mxu0 0
        %698 = vmatprep.subr.bf16.mxu0 0
        %699 = vmatpush1.bf16.msra.mxu0 0
        %700 = vmatprep.subr.bf16.mxu0 0
        %701 = vmatpush1.bf16.msra.mxu0 0
        %702 = vmatprep.mubr.bf16.mxu0 0
        %703 = vmatmul.mubr.bf16.gmra.mrb[0].mxu0 %v605
        %v704 = vpop.f32.mrb[0].mxu0
        %v705 = vadd.f32 %v656, %v704
        %v706 = vpop.f32.mrb[0].mxu0
        %v707 = vpop.f32.mrb[0].mxu0
        %v708 = vpop.f32.mrb[0].mxu0
        %709 = vdwg.mxu0
        %v710 = vpack.c.bf16 %v576, %v576
        %v711 = vpack.c.bf16 %v642, %v642
        %v712 = vpack.c.bf16 %v705, %v705
        %vm713 = vcmask 64512
        %v715 = vsel %vm713, %v710, 0
        %v718 = vsel %vm713, %v711, 0
        %720 = vmatprep.subr.bf16.mxu0 0
        %721 = vmatpush1.bf16.xpose.msra.mxu0 %v718
        %722 = vmatprep.subr.bf16.mxu0 0
        %723 = vmatpush1.bf16.xpose.msra.mxu0 0
        %724 = vmatprep.subr.bf16.mxu0 0
        %725 = vmatpush1.bf16.xpose.msra.mxu0 0
        %726 = vmatprep.subr.bf16.mxu0 0
        %727 = vmatpush1.bf16.xpose.msra.mxu0 0
        %728 = vmatprep.subr.bf16.mxu0 0
        %729 = vmatpush1.bf16.xpose.msra.mxu0 0
        %730 = vmatprep.subr.bf16.mxu0 0
        %731 = vmatpush1.bf16.xpose.msra.mxu0 0
        %732 = vmatprep.subr.bf16.mxu0 0
        %733 = vmatpush1.bf16.xpose.msra.mxu0 0
        %734 = vmatprep.subr.bf16.mxu0 0
        %735 = vmatpush1.bf16.xpose.msra.mxu0 0
        %736 = vmatprep.subr.bf16.mxu0 0
        %737 = vmatpush1.bf16.xpose.msra.mxu0 0
        %738 = vmatprep.subr.bf16.mxu0 0
        %739 = vmatpush1.bf16.xpose.msra.mxu0 0
        %740 = vmatprep.subr.bf16.mxu0 0
        %741 = vmatpush1.bf16.xpose.msra.mxu0 0
        %742 = vmatprep.subr.bf16.mxu0 0
        %743 = vmatpush1.bf16.xpose.msra.mxu0 0
        %744 = vmatprep.subr.bf16.mxu0 0
        %745 = vmatpush1.bf16.xpose.msra.mxu0 0
        %746 = vmatprep.subr.bf16.mxu0 0
        %747 = vmatpush1.bf16.xpose.msra.mxu0 0
        %748 = vmatprep.subr.bf16.mxu0 0
        %749 = vmatpush1.bf16.xpose.msra.mxu0 0
        %750 = vmatprep.subr.bf16.mxu0 0
        %751 = vmatpush1.bf16.xpose.msra.mxu0 0
        %752 = vmatprep.mubr.bf16.mxu0 0
        %753 = vmatmul.mubr.bf16.gmra.mrb[0].mxu0 %v715
        %v754 = vpop.f32.mrb[0].mxu0
        %v755 = vadd.f32 0.0, %v754
        %v756 = vpop.f32.mrb[0].mxu0
        %v757 = vpop.f32.mrb[0].mxu0
        %v758 = vpop.f32.mrb[0].mxu0
        %759 = vdwg.mxu0
        %v760 = vmul.f32 %v755, 0.35355338
        %v761 = vsel %vm713, %v760, -inf
        %762 = vmax.xlane.f32.xlu0 %v761
        %v763 = vpop.xlane.xlu0 %762
        %v764 = vsub.f32 %v760, %v763
        %v765 = vmul.f32 %v764, 1.442695
        %v766 = vpow.pop %v765
        %v767 = vsel %vm713, %v766, 0.0
        %768 = vadd.xlane.f32.xlu0 %v767
        %v769 = vpop.xlane.xlu0 %768
        %v770 = vrcp.pop %v769
        %v771 = vmul.f32 %v766, %v770
        %v772 = vpack.c.bf16 %v771, %v771
        %v774 = vsel %vm713, %v772, 0
        %vm776 = vcmask 1043456
        %v778 = vsel %vm776, %v712, 0
        %780 = vmatprep.subr.bf16.mxu0 0
        %781 = vmatpush1.bf16.msra.mxu0 %v778
        %782 = vmatprep.subr.bf16.mxu0 0
        %783 = vmatpush1.bf16.msra.mxu0 0
        %784 = vmatprep.subr.bf16.mxu0 0
        %785 = vmatpush1.bf16.msra.mxu0 0
        %786 = vmatprep.subr.bf16.mxu0 0
        %787 = vmatpush1.bf16.msra.mxu0 0
        %788 = vmatprep.subr.bf16.mxu0 0
        %789 = vmatpush1.bf16.msra.mxu0 0
        %790 = vmatprep.subr.bf16.mxu0 0
        %791 = vmatpush1.bf16.msra.mxu0 0
        %792 = vmatprep.subr.bf16.mxu0 0
        %793 = vmatpush1.bf16.msra.mxu0 0
        %794 = vmatprep.subr.bf16.mxu0 0
        %795 = vmatpush1.bf16.msra.mxu0 0
        %796 = vmatprep.subr.bf16.mxu0 0
        %797 = vmatpush1.bf16.msra.mxu0 0
        %798 = vmatprep.subr.bf16.mxu0 0
        %799 = vmatpush1.bf16.msra.mxu0 0
        %800 = vmatprep.subr.bf16.mxu0 0
        %801 = vmatpush1.bf16.msra.mxu0 0
        %802 = vmatprep.subr.bf16.mxu0 0
        %803 = vmatpush1.bf16.msra.mxu0 0
        %804 = vmatprep.subr.bf16.mxu0 0
        %805 = vmatpush1.bf16.msra.mxu0 0
        %806 = vmatprep.subr.bf16.mxu0 0
        %807 = vmatpush1.bf16.msra.mxu0 0
        %808 = vmatprep.subr.bf16.mxu0 0
        %809 = vmatpush1.bf16.msra.mxu0 0
        %810 = vmatprep.subr.bf16.mxu0 0
        %811 = vmatpush1.bf16.msra.mxu0 0
        %812 = vmatprep.mubr.bf16.mxu0 0
        %813 = vmatmul.mubr.bf16.gmra.mrb[0].mxu0 %v774
        %v814 = vpop.f32.mrb[0].mxu0
        %v815 = vadd.f32 0.0, %v814
        %v816 = vpop.f32.mrb[0].mxu0
        %v817 = vpop.f32.mrb[0].mxu0
        %v818 = vpop.f32.mrb[0].mxu0
        %819 = vdwg.mxu0
        %v820 = vpack.c.bf16 %v815, %v815
        %v821 = vld [vmem:[#allocation10] sm:$0xf]
        %823 = vrot.lane.b32.xlu0 %v710, 120
        %v824 = vpop.permute.xlu0 %823
        %826 = vrot.lane.b32.xlu0 %v711, 120
        %v827 = vpop.permute.xlu0 %826
        %v829 = vsel %vm713, %v824, 0
        %v832 = vsel %vm713, %v827, 0
        %834 = vmatprep.subr.bf16.mxu0 0
        %835 = vmatpush1.bf16.xpose.msra.mxu0 %v832
        %836 = vmatprep.subr.bf16.mxu0 0
        %837 = vmatpush1.bf16.xpose.msra.mxu0 0
        %838 = vmatprep.subr.bf16.mxu0 0
        %839 = vmatpush1.bf16.xpose.msra.mxu0 0
        %840 = vmatprep.subr.bf16.mxu0 0
        %841 = vmatpush1.bf16.xpose.msra.mxu0 0
        %842 = vmatprep.subr.bf16.mxu0 0
        %843 = vmatpush1.bf16.xpose.msra.mxu0 0
        %844 = vmatprep.subr.bf16.mxu0 0
        %845 = vmatpush1.bf16.xpose.msra.mxu0 0
        %846 = vmatprep.subr.bf16.mxu0 0
        %847 = vmatpush1.bf16.xpose.msra.mxu0 0
        %848 = vmatprep.subr.bf16.mxu0 0
        %849 = vmatpush1.bf16.xpose.msra.mxu0 0
        %850 = vmatprep.subr.bf16.mxu0 0
        %851 = vmatpush1.bf16.xpose.msra.mxu0 0
        %852 = vmatprep.subr.bf16.mxu0 0
        %853 = vmatpush1.bf16.xpose.msra.mxu0 0
        %854 = vmatprep.subr.bf16.mxu0 0
        %855 = vmatpush1.bf16.xpose.msra.mxu0 0
        %856 = vmatprep.subr.bf16.mxu0 0
        %857 = vmatpush1.bf16.xpose.msra.mxu0 0
        %858 = vmatprep.subr.bf16.mxu0 0
        %859 = vmatpush1.bf16.xpose.msra.mxu0 0
        %860 = vmatprep.subr.bf16.mxu0 0
        %861 = vmatpush1.bf16.xpose.msra.mxu0 0
        %862 = vmatprep.subr.bf16.mxu0 0
        %863 = vmatpush1.bf16.xpose.msra.mxu0 0
        %864 = vmatprep.subr.bf16.mxu0 0
        %865 = vmatpush1.bf16.xpose.msra.mxu0 0
        %866 = vmatprep.mubr.bf16.mxu0 0
        %867 = vmatmul.mubr.bf16.gmra.mrb[0].mxu0 %v829
        %v868 = vpop.f32.mrb[0].mxu0
        %v869 = vadd.f32 0.0, %v868
        %v870 = vpop.f32.mrb[0].mxu0
        %v871 = vpop.f32.mrb[0].mxu0
        %v872 = vpop.f32.mrb[0].mxu0
        %873 = vdwg.mxu0
        %v874 = vmul.f32 %v869, 0.35355338
        %v875 = vsel %vm713, %v874, -inf
        %876 = vmax.xlane.f32.xlu0 %v875
        %v877 = vpop.xlane.xlu0 %876
        %v878 = vsub.f32 %v874, %v877
        %v879 = vmul.f32 %v878, 1.442695
        %v880 = vpow.pop %v879
        %v881 = vsel %vm713, %v880, 0.0
        %882 = vadd.xlane.f32.xlu0 %v881
        %v883 = vpop.xlane.xlu0 %882
        %v884 = vrcp.pop %v883
        %v885 = vmul.f32 %v880, %v884
        %v886 = vpack.c.bf16 %v885, %v885
        %888 = vrot.lane.b32.xlu0 %v712, 120
        %v889 = vpop.permute.xlu0 %888
        %v891 = vsel %vm713, %v886, 0
        %v894 = vsel %vm776, %v889, 0
        %896 = vmatprep.subr.bf16.mxu0 0
        %897 = vmatpush1.bf16.msra.mxu0 %v894
        %898 = vmatprep.subr.bf16.mxu0 0
        %899 = vmatpush1.bf16.msra.mxu0 0
        %900 = vmatprep.subr.bf16.mxu0 0
        %901 = vmatpush1.bf16.msra.mxu0 0
        %902 = vmatprep.subr.bf16.mxu0 0
        %903 = vmatpush1.bf16.msra.mxu0 0
        %904 = vmatprep.subr.bf16.mxu0 0
        %905 = vmatpush1.bf16.msra.mxu0 0
        %906 = vmatprep.subr.bf16.mxu0 0
        %907 = vmatpush1.bf16.msra.mxu0 0
        %908 = vmatprep.subr.bf16.mxu0 0
        %909 = vmatpush1.bf16.msra.mxu0 0
        %910 = vmatprep.subr.bf16.mxu0 0
        %911 = vmatpush1.bf16.msra.mxu0 0
        %912 = vmatprep.subr.bf16.mxu0 0
        %913 = vmatpush1.bf16.msra.mxu0 0
        %914 = vmatprep.subr.bf16.mxu0 0
        %915 = vmatpush1.bf16.msra.mxu0 0
        %916 = vmatprep.subr.bf16.mxu0 0
        %917 = vmatpush1.bf16.msra.mxu0 0
        %918 = vmatprep.subr.bf16.mxu0 0
        %919 = vmatpush1.bf16.msra.mxu0 0
        %920 = vmatprep.subr.bf16.mxu0 0
        %921 = vmatpush1.bf16.msra.mxu0 0
        %922 = vmatprep.subr.bf16.mxu0 0
        %923 = vmatpush1.bf16.msra.mxu0 0
        %924 = vmatprep.subr.bf16.mxu0 0
        %925 = vmatpush1.bf16.msra.mxu0 0
        %926 = vmatprep.subr.bf16.mxu0 0
        %927 = vmatpush1.bf16.msra.mxu0 0
        %928 = vmatprep.mubr.bf16.mxu0 0
        %929 = vmatmul.mubr.bf16.gmra.mrb[0].mxu0 %v891
        %v930 = vpop.f32.mrb[0].mxu0
        %v931 = vadd.f32 0.0, %v930
        %v932 = vpop.f32.mrb[0].mxu0
        %v933 = vpop.f32.mrb[0].mxu0
        %v934 = vpop.f32.mrb[0].mxu0
        %935 = vdwg.mxu0
        %v936 = vpack.c.bf16 %v931, %v931
        %s937 = scalar_lea.vmem [#allocation10], 4
        %v938 = vld [vmem:[%s937] sm:$0xf]
        %v940 = vsel %vm713, %v936, 0
        %v943 = vsel %vm776, %v938, 0
        %945 = vmatprep.subr.bf16.mxu0 0
        %946 = vmatpush1.bf16.msra.mxu0 %v943
        %947 = vmatprep.subr.bf16.mxu0 0
        %948 = vmatpush1.bf16.msra.mxu0 0
        %949 = vmatprep.subr.bf16.mxu0 0
        %950 = vmatpush1.bf16.msra.mxu0 0
        %951 = vmatprep.subr.bf16.mxu0 0
        %952 = vmatpush1.bf16.msra.mxu0 0
        %953 = vmatprep.subr.bf16.mxu0 0
        %954 = vmatpush1.bf16.msra.mxu0 0
        %955 = vmatprep.subr.bf16.mxu0 0
        %956 = vmatpush1.bf16.msra.mxu0 0
        %957 = vmatprep.subr.bf16.mxu0 0
        %958 = vmatpush1.bf16.msra.mxu0 0
        %959 = vmatprep.subr.bf16.mxu0 0
        %960 = vmatpush1.bf16.msra.mxu0 0
        %961 = vmatprep.subr.bf16.mxu0 0
        %962 = vmatpush1.bf16.msra.mxu0 0
        %963 = vmatprep.subr.bf16.mxu0 0
        %964 = vmatpush1.bf16.msra.mxu0 0
        %965 = vmatprep.subr.bf16.mxu0 0
        %966 = vmatpush1.bf16.msra.mxu0 0
        %967 = vmatprep.subr.bf16.mxu0 0
        %968 = vmatpush1.bf16.msra.mxu0 0
        %969 = vmatprep.subr.bf16.mxu0 0
        %970 = vmatpush1.bf16.msra.mxu0 0
        %971 = vmatprep.subr.bf16.mxu0 0
        %972 = vmatpush1.bf16.msra.mxu0 0
        %973 = vmatprep.subr.bf16.mxu0 0
        %974 = vmatpush1.bf16.msra.mxu0 0
        %975 = vmatprep.subr.bf16.mxu0 0
        %976 = vmatpush1.bf16.msra.mxu0 0
        %977 = vmatprep.mubr.bf16.mxu0 0
        %978 = vmatmul.mubr.bf16.gmra.mrb[0].mxu0 %v940
        %v979 = vpop.f32.mrb[0].mxu0
        %v980 = vadd.f32 0.0, %v979
        %v981 = vpop.f32.mrb[0].mxu0
        %v982 = vpop.f32.mrb[0].mxu0
        %v983 = vpop.f32.mrb[0].mxu0
        %984 = vdwg.mxu0
        %v986 = vsel %vm713, %v820, 0
        %v989 = vsel %vm776, %v821, 0
        %991 = vmatprep.subr.bf16.mxu0 0
        %992 = vmatpush1.bf16.msra.mxu0 %v989
        %993 = vmatprep.subr.bf16.mxu0 0
        %994 = vmatpush1.bf16.msra.mxu0 0
        %995 = vmatprep.subr.bf16.mxu0 0
        %996 = vmatpush1.bf16.msra.mxu0 0
        %997 = vmatprep.subr.bf16.mxu0 0
        %998 = vmatpush1.bf16.msra.mxu0 0
        %999 = vmatprep.subr.bf16.mxu0 0
        %1000 = vmatpush1.bf16.msra.mxu0 0
        %1001 = vmatprep.subr.bf16.mxu0 0
        %1002 = vmatpush1.bf16.msra.mxu0 0
        %1003 = vmatprep.subr.bf16.mxu0 0
        %1004 = vmatpush1.bf16.msra.mxu0 0
        %1005 = vmatprep.subr.bf16.mxu0 0
        %1006 = vmatpush1.bf16.msra.mxu0 0
        %1007 = vmatprep.subr.bf16.mxu0 0
        %1008 = vmatpush1.bf16.msra.mxu0 0
        %1009 = vmatprep.subr.bf16.mxu0 0
        %1010 = vmatpush1.bf16.msra.mxu0 0
        %1011 = vmatprep.subr.bf16.mxu0 0
        %1012 = vmatpush1.bf16.msra.mxu0 0
        %1013 = vmatprep.subr.bf16.mxu0 0
        %1014 = vmatpush1.bf16.msra.mxu0 0
        %1015 = vmatprep.subr.bf16.mxu0 0
        %1016 = vmatpush1.bf16.msra.mxu0 0
        %1017 = vmatprep.subr.bf16.mxu0 0
        %1018 = vmatpush1.bf16.msra.mxu0 0
        %1019 = vmatprep.subr.bf16.mxu0 0
        %1020 = vmatpush1.bf16.msra.mxu0 0
        %1021 = vmatprep.subr.bf16.mxu0 0
        %1022 = vmatpush1.bf16.msra.mxu0 0
        %1023 = vmatprep.mubr.bf16.mxu0 0
        %1024 = vmatmul.mubr.bf16.gmra.mrb[0].mxu0 %v986
        %v1025 = vpop.f32.mrb[0].mxu0
        %v1026 = vadd.f32 %v980, %v1025
        %v1027 = vpop.f32.mrb[0].mxu0
        %v1028 = vpop.f32.mrb[0].mxu0
        %v1029 = vpop.f32.mrb[0].mxu0
        %1030 = vdwg.mxu0
        %1031 = vrot.lane.b32.xlu0 %v710, 112
        %v1032 = vpop.permute.xlu0 %1031
        %1033 = vrot.lane.b32.xlu0 %v711, 112
        %v1034 = vpop.permute.xlu0 %1033
        %v1036 = vsel %vm713, %v1032, 0
        %v1039 = vsel %vm713, %v1034, 0
        %1041 = vmatprep.subr.bf16.mxu0 0
        %1042 = vmatpush1.bf16.xpose.msra.mxu0 %v1039
        %1043 = vmatprep.subr.bf16.mxu0 0
        %1044 = vmatpush1.bf16.xpose.msra.mxu0 0
        %1045 = vmatprep.subr.bf16.mxu0 0
        %1046 = vmatpush1.bf16.xpose.msra.mxu0 0
        %1047 = vmatprep.subr.bf16.mxu0 0
        %1048 = vmatpush1.bf16.xpose.msra.mxu0 0
        %1049 = vmatprep.subr.bf16.mxu0 0
        %1050 = vmatpush1.bf16.xpose.msra.mxu0 0
        %1051 = vmatprep.subr.bf16.mxu0 0
        %1052 = vmatpush1.bf16.xpose.msra.mxu0 0
        %1053 = vmatprep.subr.bf16.mxu0 0
        %1054 = vmatpush1.bf16.xpose.msra.mxu0 0
        %1055 = vmatprep.subr.bf16.mxu0 0
        %1056 = vmatpush1.bf16.xpose.msra.mxu0 0
        %1057 = vmatprep.subr.bf16.mxu0 0
        %1058 = vmatpush1.bf16.xpose.msra.mxu0 0
        %1059 = vmatprep.subr.bf16.mxu0 0
        %1060 = vmatpush1.bf16.xpose.msra.mxu0 0
        %1061 = vmatprep.subr.bf16.mxu0 0
        %1062 = vmatpush1.bf16.xpose.msra.mxu0 0
        %1063 = vmatprep.subr.bf16.mxu0 0
        %1064 = vmatpush1.bf16.xpose.msra.mxu0 0
        %1065 = vmatprep.subr.bf16.mxu0 0
        %1066 = vmatpush1.bf16.xpose.msra.mxu0 0
        %1067 = vmatprep.subr.bf16.mxu0 0
        %1068 = vmatpush1.bf16.xpose.msra.mxu0 0
        %1069 = vmatprep.subr.bf16.mxu0 0
        %1070 = vmatpush1.bf16.xpose.msra.mxu0 0
        %1071 = vmatprep.subr.bf16.mxu0 0
        %1072 = vmatpush1.bf16.xpose.msra.mxu0 0
        %1073 = vmatprep.mubr.bf16.mxu0 0
        %1074 = vmatmul.mubr.bf16.gmra.mrb[0].mxu0 %v1036
        %v1075 = vpop.f32.mrb[0].mxu0
        %v1076 = vadd.f32 0.0, %v1075
        %v1077 = vpop.f32.mrb[0].mxu0
        %v1078 = vpop.f32.mrb[0].mxu0
        %v1079 = vpop.f32.mrb[0].mxu0
        %1080 = vdwg.mxu0
        %v1081 = vmul.f32 %v1076, 0.35355338
        %v1082 = vsel %vm713, %v1081, -inf
        %1083 = vmax.xlane.f32.xlu0 %v1082
        %v1084 = vpop.xlane.xlu0 %1083
        %v1085 = vsub.f32 %v1081, %v1084
        %v1086 = vmul.f32 %v1085, 1.442695
        %v1087 = vpow.pop %v1086
        %v1088 = vsel %vm713, %v1087, 0.0
        %1089 = vadd.xlane.f32.xlu0 %v1088
        %v1090 = vpop.xlane.xlu0 %1089
        %v1091 = vrcp.pop %v1090
        %v1092 = vmul.f32 %v1087, %v1091
        %v1093 = vpack.c.bf16 %v1092, %v1092
        %1094 = vrot.lane.b32.xlu0 %v712, 112
        %v1095 = vpop.permute.xlu0 %1094
        %v1097 = vsel %vm713, %v1093, 0
        %v1100 = vsel %vm776, %v1095, 0
        %1102 = vmatprep.subr.bf16.mxu0 0
        %1103 = vmatpush1.bf16.msra.mxu0 %v1100
        %1104 = vmatprep.subr.bf16.mxu0 0
        %1105 = vmatpush1.bf16.msra.mxu0 0
        %1106 = vmatprep.subr.bf16.mxu0 0
        %1107 = vmatpush1.bf16.msra.mxu0 0
        %1108 = vmatprep.subr.bf16.mxu0 0
        %1109 = vmatpush1.bf16.msra.mxu0 0
        %1110 = vmatprep.subr.bf16.mxu0 0
        %1111 = vmatpush1.bf16.msra.mxu0 0
        %1112 = vmatprep.subr.bf16.mxu0 0
        %1113 = vmatpush1.bf16.msra.mxu0 0
        %1114 = vmatprep.subr.bf16.mxu0 0
        %1115 = vmatpush1.bf16.msra.mxu0 0
        %1116 = vmatprep.subr.bf16.mxu0 0
        %1117 = vmatpush1.bf16.msra.mxu0 0
        %1118 = vmatprep.subr.bf16.mxu0 0
        %1119 = vmatpush1.bf16.msra.mxu0 0
        %1120 = vmatprep.subr.bf16.mxu0 0
        %1121 = vmatpush1.bf16.msra.mxu0 0
        %1122 = vmatprep.subr.bf16.mxu0 0
        %1123 = vmatpush1.bf16.msra.mxu0 0
        %1124 = vmatprep.subr.bf16.mxu0 0
        %1125 = vmatpush1.bf16.msra.mxu0 0
        %1126 = vmatprep.subr.bf16.mxu0 0
        %1127 = vmatpush1.bf16.msra.mxu0 0
        %1128 = vmatprep.subr.bf16.mxu0 0
        %1129 = vmatpush1.bf16.msra.mxu0 0
        %1130 = vmatprep.subr.bf16.mxu0 0
        %1131 = vmatpush1.bf16.msra.mxu0 0
        %1132 = vmatprep.subr.bf16.mxu0 0
        %1133 = vmatpush1.bf16.msra.mxu0 0
        %1134 = vmatprep.mubr.bf16.mxu0 0
        %1135 = vmatmul.mubr.bf16.gmra.mrb[0].mxu0 %v1097
        %v1136 = vpop.f32.mrb[0].mxu0
        %v1137 = vadd.f32 0.0, %v1136
        %v1138 = vpop.f32.mrb[0].mxu0
        %v1139 = vpop.f32.mrb[0].mxu0
        %v1140 = vpop.f32.mrb[0].mxu0
        %1141 = vdwg.mxu0
        %v1142 = vpack.c.bf16 %v1137, %v1137
        %s1143 = scalar_lea.vmem [#allocation10], 8
        %v1144 = vld [vmem:[%s1143] sm:$0xf]
        %v1146 = vsel %vm713, %v1142, 0
        %v1149 = vsel %vm776, %v1144, 0
        %1151 = vmatprep.subr.bf16.mxu0 0
        %1152 = vmatpush1.bf16.msra.mxu0 %v1149
        %1153 = vmatprep.subr.bf16.mxu0 0
        %1154 = vmatpush1.bf16.msra.mxu0 0
        %1155 = vmatprep.subr.bf16.mxu0 0
        %1156 = vmatpush1.bf16.msra.mxu0 0
        %1157 = vmatprep.subr.bf16.mxu0 0
        %1158 = vmatpush1.bf16.msra.mxu0 0
        %1159 = vmatprep.subr.bf16.mxu0 0
        %1160 = vmatpush1.bf16.msra.mxu0 0
        %1161 = vmatprep.subr.bf16.mxu0 0
        %1162 = vmatpush1.bf16.msra.mxu0 0
        %1163 = vmatprep.subr.bf16.mxu0 0
        %1164 = vmatpush1.bf16.msra.mxu0 0
        %1165 = vmatprep.subr.bf16.mxu0 0
        %1166 = vmatpush1.bf16.msra.mxu0 0
        %1167 = vmatprep.subr.bf16.mxu0 0
        %1168 = vmatpush1.bf16.msra.mxu0 0
        %1169 = vmatprep.subr.bf16.mxu0 0
        %1170 = vmatpush1.bf16.msra.mxu0 0
        %1171 = vmatprep.subr.bf16.mxu0 0
        %1172 = vmatpush1.bf16.msra.mxu0 0
        %1173 = vmatprep.subr.bf16.mxu0 0
        %1174 = vmatpush1.bf16.msra.mxu0 0
        %1175 = vmatprep.subr.bf16.mxu0 0
        %1176 = vmatpush1.bf16.msra.mxu0 0
        %1177 = vmatprep.subr.bf16.mxu0 0
        %1178 = vmatpush1.bf16.msra.mxu0 0
        %1179 = vmatprep.subr.bf16.mxu0 0
        %1180 = vmatpush1.bf16.msra.mxu0 0
        %1181 = vmatprep.subr.bf16.mxu0 0
        %1182 = vmatpush1.bf16.msra.mxu0 0
        %1183 = vmatprep.mubr.bf16.mxu0 0
        %1184 = vmatmul.mubr.bf16.gmra.mrb[0].mxu0 %v1146
        %v1185 = vpop.f32.mrb[0].mxu0
        %v1186 = vadd.f32 0.0, %v1185
        %v1187 = vpop.f32.mrb[0].mxu0
        %v1188 = vpop.f32.mrb[0].mxu0
        %v1189 = vpop.f32.mrb[0].mxu0
        %1190 = vdwg.mxu0
        %v1191 = vadd.f32 %v1026, %v1186
        %1192 = vrot.lane.b32.xlu0 %v710, 104
        %v1193 = vpop.permute.xlu0 %1192
        %1194 = vrot.lane.b32.xlu0 %v711, 104
        %v1195 = vpop.permute.xlu0 %1194
        %v1197 = vsel %vm713, %v1193, 0
        %v1200 = vsel %vm713, %v1195, 0
        %1202 = vmatprep.subr.bf16.mxu0 0
        %1203 = vmatpush1.bf16.xpose.msra.mxu0 %v1200
        %1204 = vmatprep.subr.bf16.mxu0 0
        %1205 = vmatpush1.bf16.xpose.msra.mxu0 0
        %1206 = vmatprep.subr.bf16.mxu0 0
        %1207 = vmatpush1.bf16.xpose.msra.mxu0 0
        %1208 = vmatprep.subr.bf16.mxu0 0
        %1209 = vmatpush1.bf16.xpose.msra.mxu0 0
        %1210 = vmatprep.subr.bf16.mxu0 0
        %1211 = vmatpush1.bf16.xpose.msra.mxu0 0
        %1212 = vmatprep.subr.bf16.mxu0 0
        %1213 = vmatpush1.bf16.xpose.msra.mxu0 0
        %1214 = vmatprep.subr.bf16.mxu0 0
        %1215 = vmatpush1.bf16.xpose.msra.mxu0 0
        %1216 = vmatprep.subr.bf16.mxu0 0
        %1217 = vmatpush1.bf16.xpose.msra.mxu0 0
        %1218 = vmatprep.subr.bf16.mxu0 0
        %1219 = vmatpush1.bf16.xpose.msra.mxu0 0
        %1220 = vmatprep.subr.bf16.mxu0 0
        %1221 = vmatpush1.bf16.xpose.msra.mxu0 0
        %1222 = vmatprep.subr.bf16.mxu0 0
        %1223 = vmatpush1.bf16.xpose.msra.mxu0 0
        %1224 = vmatprep.subr.bf16.mxu0 0
        %1225 = vmatpush1.bf16.xpose.msra.mxu0 0
        %1226 = vmatprep.subr.bf16.mxu0 0
        %1227 = vmatpush1.bf16.xpose.msra.mxu0 0
        %1228 = vmatprep.subr.bf16.mxu0 0
        %1229 = vmatpush1.bf16.xpose.msra.mxu0 0
        %1230 = vmatprep.subr.bf16.mxu0 0
        %1231 = vmatpush1.bf16.xpose.msra.mxu0 0
        %1232 = vmatprep.subr.bf16.mxu0 0
        %1233 = vmatpush1.bf16.xpose.msra.mxu0 0
        %1234 = vmatprep.mubr.bf16.mxu0 0
        %1235 = vmatmul.mubr.bf16.gmra.mrb[0].mxu0 %v1197
        %v1236 = vpop.f32.mrb[0].mxu0
        %v1237 = vadd.f32 0.0, %v1236
        %v1238 = vpop.f32.mrb[0].mxu0
        %v1239 = vpop.f32.mrb[0].mxu0
        %v1240 = vpop.f32.mrb[0].mxu0
        %1241 = vdwg.mxu0
        %v1242 = vmul.f32 %v1237, 0.35355338
        %v1243 = vsel %vm713, %v1242, -inf
        %1244 = vmax.xlane.f32.xlu0 %v1243
        %v1245 = vpop.xlane.xlu0 %1244
        %v1246 = vsub.f32 %v1242, %v1245
        %v1247 = vmul.f32 %v1246, 1.442695
        %v1248 = vpow.pop %v1247
        %v1249 = vsel %vm713, %v1248, 0.0
        %1250 = vadd.xlane.f32.xlu0 %v1249
        %v1251 = vpop.xlane.xlu0 %1250
        %v1252 = vrcp.pop %v1251
        %v1253 = vmul.f32 %v1248, %v1252
        %v1254 = vpack.c.bf16 %v1253, %v1253
        %1255 = vrot.lane.b32.xlu0 %v712, 104
        %v1256 = vpop.permute.xlu0 %1255
        %v1258 = vsel %vm713, %v1254, 0
        %v1261 = vsel %vm776, %v1256, 0
        %1263 = vmatprep.subr.bf16.mxu0 0
        %1264 = vmatpush1.bf16.msra.mxu0 %v1261
        %1265 = vmatprep.subr.bf16.mxu0 0
        %1266 = vmatpush1.bf16.msra.mxu0 0
        %1267 = vmatprep.subr.bf16.mxu0 0
        %1268 = vmatpush1.bf16.msra.mxu0 0
        %1269 = vmatprep.subr.bf16.mxu0 0
        %1270 = vmatpush1.bf16.msra.mxu0 0
        %1271 = vmatprep.subr.bf16.mxu0 0
        %1272 = vmatpush1.bf16.msra.mxu0 0
        %1273 = vmatprep.subr.bf16.mxu0 0
        %1274 = vmatpush1.bf16.msra.mxu0 0
        %1275 = vmatprep.subr.bf16.mxu0 0
        %1276 = vmatpush1.bf16.msra.mxu0 0
        %1277 = vmatprep.subr.bf16.mxu0 0
        %1278 = vmatpush1.bf16.msra.mxu0 0
        %1279 = vmatprep.subr.bf16.mxu0 0
        %1280 = vmatpush1.bf16.msra.mxu0 0
        %1281 = vmatprep.subr.bf16.mxu0 0
        %1282 = vmatpush1.bf16.msra.mxu0 0
        %1283 = vmatprep.subr.bf16.mxu0 0
        %1284 = vmatpush1.bf16.msra.mxu0 0
        %1285 = vmatprep.subr.bf16.mxu0 0
        %1286 = vmatpush1.bf16.msra.mxu0 0
        %1287 = vmatprep.subr.bf16.mxu0 0
        %1288 = vmatpush1.bf16.msra.mxu0 0
        %1289 = vmatprep.subr.bf16.mxu0 0
        %1290 = vmatpush1.bf16.msra.mxu0 0
        %1291 = vmatprep.subr.bf16.mxu0 0
        %1292 = vmatpush1.bf16.msra.mxu0 0
        %1293 = vmatprep.subr.bf16.mxu0 0
        %1294 = vmatpush1.bf16.msra.mxu0 0
        %1295 = vmatprep.mubr.bf16.mxu0 0
        %1296 = vmatmul.mubr.bf16.gmra.mrb[0].mxu0 %v1258
        %v1297 = vpop.f32.mrb[0].mxu0
        %v1298 = vadd.f32 0.0, %v1297
        %v1299 = vpop.f32.mrb[0].mxu0
        %v1300 = vpop.f32.mrb[0].mxu0
        %v1301 = vpop.f32.mrb[0].mxu0
        %1302 = vdwg.mxu0
        %v1303 = vpack.c.bf16 %v1298, %v1298
        %s1304 = scalar_lea.vmem [#allocation10], 12
        %v1305 = vld [vmem:[%s1304] sm:$0xf]
        %v1307 = vsel %vm713, %v1303, 0
        %v1310 = vsel %vm776, %v1305, 0
        %1312 = vmatprep.subr.bf16.mxu0 0
        %1313 = vmatpush1.bf16.msra.mxu0 %v1310
        %1314 = vmatprep.subr.bf16.mxu0 0
        %1315 = vmatpush1.bf16.msra.mxu0 0
        %1316 = vmatprep.subr.bf16.mxu0 0
        %1317 = vmatpush1.bf16.msra.mxu0 0
        %1318 = vmatprep.subr.bf16.mxu0 0
        %1319 = vmatpush1.bf16.msra.mxu0 0
        %1320 = vmatprep.subr.bf16.mxu0 0
        %1321 = vmatpush1.bf16.msra.mxu0 0
        %1322 = vmatprep.subr.bf16.mxu0 0
        %1323 = vmatpush1.bf16.msra.mxu0 0
        %1324 = vmatprep.subr.bf16.mxu0 0
        %1325 = vmatpush1.bf16.msra.mxu0 0
        %1326 = vmatprep.subr.bf16.mxu0 0
        %1327 = vmatpush1.bf16.msra.mxu0 0
        %1328 = vmatprep.subr.bf16.mxu0 0
        %1329 = vmatpush1.bf16.msra.mxu0 0
        %1330 = vmatprep.subr.bf16.mxu0 0
        %1331 = vmatpush1.bf16.msra.mxu0 0
        %1332 = vmatprep.subr.bf16.mxu0 0
        %1333 = vmatpush1.bf16.msra.mxu0 0
        %1334 = vmatprep.subr.bf16.mxu0 0
        %1335 = vmatpush1.bf16.msra.mxu0 0
        %1336 = vmatprep.subr.bf16.mxu0 0
        %1337 = vmatpush1.bf16.msra.mxu0 0
        %1338 = vmatprep.subr.bf16.mxu0 0
        %1339 = vmatpush1.bf16.msra.mxu0 0
        %1340 = vmatprep.subr.bf16.mxu0 0
        %1341 = vmatpush1.bf16.msra.mxu0 0
        %1342 = vmatprep.subr.bf16.mxu0 0
        %1343 = vmatpush1.bf16.msra.mxu0 0
        %1344 = vmatprep.mubr.bf16.mxu0 0
        %1345 = vmatmul.mubr.bf16.gmra.mrb[0].mxu0 %v1307
        %v1346 = vpop.f32.mrb[0].mxu0
        %v1347 = vadd.f32 0.0, %v1346
        %v1348 = vpop.f32.mrb[0].mxu0
        %v1349 = vpop.f32.mrb[0].mxu0
        %v1350 = vpop.f32.mrb[0].mxu0
        %1351 = vdwg.mxu0
        %v1352 = vadd.f32 %v1191, %v1347
        %v1353 = vld [vmem:[%s9] sm:$0x1]
        %v1355 = vlaneseq
        %v1356 = vshrl.u32 %v1355, 7
        %v1357 = vsub.s32 0, %v1356
        %v1358 = vrot.slane %v1353, %v1357
        %v1360 = vadd.f32 %v1352, %v1358
        %v1361 = vadd.f32 %v1360, %v510
        %v1362 = vld [vmem:[%s10] sm:$0x1]
        %v1363 = vld [vmem:[%s11] sm:$0x1]
        %v1364 = vsel %vm537, %v1361, 0.0
        %1365 = vadd.xlane.f32.xlu0 %v1364
        %v1366 = vpop.xlane.xlu0 %1365
        %v1367 = vrcp.pop 32.0
        %v1368 = vmul.f32 %v1366, %v1367
        %v1369 = vsub.f32 %v1361, %v1368
        %v1370 = vmul.f32 %v1369, %v1369
        %v1371 = vsel %vm537, %v1370, 0.0
        %1372 = vadd.xlane.f32.xlu0 %v1371
        %v1373 = vpop.xlane.xlu0 %1372
        %v1374 = vmul.f32 %v1373, %v1367
        %v1375 = vadd.f32 %v1374, 1e-12
        %v1376 = vrsqrt.pop %v1375
        %v1377 = vmul.f32 %v1369, %v1376
        %v1379 = vlaneseq
        %v1380 = vshrl.u32 %v1379, 7
        %v1381 = vsub.s32 0, %v1380
        %v1382 = vrot.slane %v1362, %v1381
        %v1384 = vmul.f32 %v1377, %v1382
        %v1386 = vlaneseq
        %v1387 = vshrl.u32 %v1386, 7
        %v1388 = vsub.s32 0, %v1387
        %v1389 = vrot.slane %v1363, %v1388
        %v1391 = vadd.f32 %v1384, %v1389
        %1392 = vst.msk [vmem:[%s508] sm:$0xff] %vm537, %v1391
        %s1393 = sand.u32 %s303, 1
        %s1394 = scalar_lea.sflag [#allocation4], %s1393
        %s1395 = sand.u32 %s303, 1
        %s1396 = smul.addr %s1395, 8
        %s1397 = scalar_lea.vmem [#allocation11], %s1396
        // Predicated region
        $region89: #{tpu_custom_call.1} parent=67 // pred_check
          %p1398 = pneg %p313
        $region90: #{tpu_custom_call.1} parent=67 // pred_check_branch
          %1400 = sbr.rel (%p1398) target = $region92
        $region91: #{tpu_custom_call.1} parent=67 // pred_region
          %s1402 = ssub.s32 128, 128
          %1403 = vsyncadd %s1394, %s1402
          %s1404 = smul.addr %s33, 128
          %s1405 = scalar_lea.hbm %s12, %s1404
          %s1407 = sshll.u32 %s1397, 4
          %s1408 = int_to_ptr.vmem [resolvable:$true] %s1407
          %1410 = dma.vmem_to_hbm [thread:$0]  %s1408, 128, %s1405, %s1394
        $region92: #{tpu_custom_call.1} parent=67 // pred_fallthru
          _
      $region68: #{tpu_custom_call.1} parent=5 // pred_fallthru
        _
      %p1411 = scmp.le.s32.totalorder 2, %s28
      // Predicated region
      $region93: #{tpu_custom_call.1} parent=5 // pred_check
        %p1412 = pneg %p1411
      $region94: #{tpu_custom_call.1} parent=5 // pred_check_branch
        %1414 = sbr.rel (%p1412) target = $region96
      $region95: #{tpu_custom_call.1} parent=5 // pred_region
        %s1415 = ssub.s32 %s28, 2
        // Predicated region
        $region97: #{tpu_custom_call.1} parent=95 // pred_check
          %p1416 = pneg %p319
        $region98: #{tpu_custom_call.1} parent=95 // pred_check_branch
          %1418 = sbr.rel (%p1416) target = $region100
        $region99: #{tpu_custom_call.1} parent=95 // pred_region
          %s1419 = sand.u32 %s304, 1
          %s1420 = scalar_lea.sflag [#allocation4], %s1419
          %s1421 = sand.u32 %s304, 1
          %s1422 = smul.addr %s1421, 8
          %s1423 = scalar_lea.vmem [#allocation11], %s1422
          %1424 = dma.done %s1420, 128
        $region100: #{tpu_custom_call.1} parent=95 // pred_fallthru
          _
      $region96: #{tpu_custom_call.1} parent=5 // pred_fallthru
        _
    $region6: #{tpu_custom_call.1} parent=1 // loop_footer
      %s32 = sadd.s32 1, %s28
    $region7: #{tpu_custom_call.1} parent=1 // loop_footer_branch
      %27 = sbr.rel target = $region3
    $region8: #{tpu_custom_call.1} parent=1 // loop_exit
      _
    %1425 = vsyncpa [#allocation3], 1
    %s1426 = scalar_lea.sflag [#allocation3], 1
    %1427 = vsyncpa %s1426, 1
    %1428 = vsyncpa [#allocation6], 1
    %s1429 = scalar_lea.sflag [#allocation6], 1
    %1430 = vsyncpa %s1429, 1
    %1431 = vsyncpa [#allocation9], 1
    %1432 = vsyncpa [#allocation4], 1
    %s1433 = scalar_lea.sflag [#allocation4], 1
    %1434 = vsyncpa %s1433, 1

</llo_original>
